<compile_context>
chip_gen: v7x
topology: tpu7x:2x2x1
jax: 0.10.0
libtpu: 0.0.40
codegen_flags: <defaults>
</compile_context>

<pallas_src>
import jax
import jax.numpy as jnp
import numpy as np
from jax.experimental import pallas as pl
from jax.experimental.pallas import tpu as pltpu


def unit_kernel(x_ref, w_ref, gamma_ref, beta_ref, o_ref,
                xp_scr, sum_scr, sq_scr):
    # x_ref     : [1, Cin, H, W]   current image (NCHW block)
    # w_ref     : [Cout, 9*Cin]    im2col-packed conv weight
    # gamma_ref : [Cout, 1]        BN scale
    # beta_ref  : [Cout, 1]        BN shift
    # o_ref     : [N, Cout, H*W]   full output, VMEM-resident across the grid
    # xp_scr    : [Cin, H+2, W+2]  zero-padded image scratch (halo = pad 1)
    # sum_scr   : [Cout, 1]        running per-channel sum
    # sq_scr    : [Cout, 1]        running per-channel sum of squares
    n = pl.program_id(0)
    num_images = pl.num_programs(0)

    _, cin, h, w = x_ref.shape
    hw = h * w

    @pl.when(n == 0)
    def _init():
        # Zero the halo once; the interior is overwritten for every image.
        xp_scr[...] = jnp.zeros_like(xp_scr)
        sum_scr[...] = jnp.zeros_like(sum_scr)
        sq_scr[...] = jnp.zeros_like(sq_scr)

    # Place the image in the interior of the padded scratch (pad=1 stays zero).
    xp_scr[:, 1:h + 1, 1:w + 1] = x_ref[0]
    xp = xp_scr[...]

    # In-kernel im2col: 9 shifted views, one concat + one reshape, then a
    # single MXU matmul with K = 9*Cin.
    cols = [xp[:, ky:ky + h, kx:kx + w] for ky in range(3) for kx in range(3)]
    col = jnp.concatenate(cols, axis=0).reshape(9 * cin, hw)       # [9*Cin, H*W]
    y = jnp.dot(w_ref[...], col, preferred_element_type=jnp.float32)  # [Cout, H*W]

    # Stash the unnormalized conv output in the resident, lane-dense output.
    o_ref[n] = y

    # One-pass BN statistics (accumulated across the grid / batch).
    sum_scr[...] += jnp.sum(y, axis=1, keepdims=True)
    sq_scr[...] += jnp.sum(y * y, axis=1, keepdims=True)

    # Finalize on the last grid step: global batch stats -> normalize + ReLU.
    @pl.when(n == num_images - 1)
    def _finalize():
        inv_count = 1.0 / float(o_ref.shape[0] * hw)
        mean = sum_scr[...] * inv_count                      # [Cout, 1]
        var = sq_scr[...] * inv_count - mean * mean          # biased variance
        inv = jax.lax.rsqrt(var + 1e-5)                      # EUP rsqrt
        scale = inv * gamma_ref[...]                         # [Cout, 1]
        shift = beta_ref[...] - mean * scale                 # [Cout, 1]
        y_all = o_ref[...]                                   # [N, Cout, H*W]
        o_ref[...] = jnp.maximum(
            y_all * scale[None, :, :] + shift[None, :, :], 0.0)


def unit_forward(x_nchw, w_oihw, b, gamma, beta):
    """Pallas implementation of Unit.forward. Input/output are NCHW."""
    N, Cin, H, W = x_nchw.shape
    Cout = w_oihw.shape[0]
    HW = H * W

    x = x_nchw.astype(jnp.float32)
    # im2col-packed weight, ordered (ky, kx, cin) to match the kernel's patches.
    w2 = jnp.transpose(w_oihw.astype(jnp.float32), (0, 2, 3, 1)).reshape(Cout, 9 * Cin)
    # Conv bias cancels exactly under training-mode BatchNorm -> not used.
    del b
    gamma2 = gamma.reshape(Cout, 1).astype(jnp.float32)
    beta2 = beta.reshape(Cout, 1).astype(jnp.float32)

    out_flat = pl.pallas_call(
        unit_kernel,
        out_shape=jax.ShapeDtypeStruct((N, Cout, HW), jnp.float32),
        grid_spec=pltpu.PrefetchScalarGridSpec(
            num_scalar_prefetch=0,
            grid=(N,),  # one image per grid step; input DMA is double-buffered
            in_specs=[
                pl.BlockSpec((1, Cin, H, W), lambda n: (n, 0, 0, 0)),
                pl.BlockSpec((Cout, 9 * Cin), lambda n: (0, 0)),
                pl.BlockSpec((Cout, 1), lambda n: (0, 0)),
                pl.BlockSpec((Cout, 1), lambda n: (0, 0)),
            ],
            # Constant block index -> output stays resident in VMEM across the
            # whole grid (needed because BN statistics are global).
            out_specs=pl.BlockSpec((N, Cout, HW), lambda n: (0, 0, 0)),
            scratch_shapes=[
                pltpu.VMEM((Cin, H + 2, W + 2), jnp.float32),  # padded image
                pltpu.VMEM((Cout, 1), jnp.float32),            # sum
                pltpu.VMEM((Cout, 1), jnp.float32),            # sum of squares
            ],
        ),
        compiler_params=pltpu.CompilerParams(
            # The BN reduction + resident output couple all grid steps, so the
            # batch axis must be "arbitrary" (no megacore split possible here).
            dimension_semantics=("arbitrary",),
        ),
    )(x, w2, gamma2, beta2)

    # Lane-dense [N, Cout, H*W] -> NCHW for the caller.
    return out_flat.reshape(N, Cout, H, W)


def unit_reference(x_nchw, w_oihw, b, gamma, beta):
    """Plain-JAX reference matching PyTorch Conv2d+BatchNorm2d(train)+ReLU."""
    y = jax.lax.conv_general_dilated(
        x_nchw, w_oihw,
        window_strides=(1, 1),
        padding=((1, 1), (1, 1)),
        dimension_numbers=("NCHW", "OIHW", "NCHW"),
    )
    y = y + b[None, :, None, None]
    mean = y.mean(axis=(0, 2, 3), keepdims=True)
    var = ((y - mean) ** 2).mean(axis=(0, 2, 3), keepdims=True)
    y = (y - mean) * jax.lax.rsqrt(var + 1e-5)
    y = y * gamma[None, :, None, None] + beta[None, :, None, None]
    return jnp.maximum(y, 0.0)


if __name__ == "__main__":
    # Unit(in_channels=4, out_channels=8) at small shapes.
    N, Cin, Cout, H, W = 2, 4, 8, 16, 16

    key = jax.random.PRNGKey(0)
    kx, kw, kb = jax.random.split(key, 3)

    x = jax.random.normal(kx, (N, Cin, H, W), dtype=jnp.float32)
    w = 0.1 * jax.random.normal(kw, (Cout, Cin, 3, 3), dtype=jnp.float32)
    b = 0.1 * jax.random.normal(kb, (Cout,), dtype=jnp.float32)
    gamma = jnp.ones((Cout,), dtype=jnp.float32)   # BatchNorm2d default weight
    beta = jnp.zeros((Cout,), dtype=jnp.float32)   # BatchNorm2d default bias

    out = jax.block_until_ready(unit_forward(x, w, b, gamma, beta))
    ref = jax.block_until_ready(unit_reference(x, w, b, gamma, beta))
    np.testing.assert_allclose(np.asarray(out), np.asarray(ref),
                               rtol=1e-4, atol=1e-4)

    print("KERNEL_OK")
</pallas_src>

<mosaic_0001>
module attributes {stable_mosaic.version = 11 : i64} {
  func.func @unit_kernel(%arg0: i32, %arg1: memref<1x4x16x16xf32, #tpu.memory_space<vmem>>, %arg2: memref<8x36xf32, #tpu.memory_space<vmem>>, %arg3: memref<8x1xf32, #tpu.memory_space<vmem>>, %arg4: memref<8x1xf32, #tpu.memory_space<vmem>>, %arg5: memref<2x8x256xf32, #tpu.memory_space<vmem>>, %arg6: memref<4x18x18xf32, #tpu.memory_space<vmem>>, %arg7: memref<8x1xf32, #tpu.memory_space<vmem>>, %arg8: memref<8x1xf32, #tpu.memory_space<vmem>>) attributes {dimension_semantics = [#tpu.dimension_semantics<arbitrary>], iteration_bounds = array<i64: 2>, scalar_prefetch = 0 : i64, scratch_operands = 3 : i64, tpu.core_type = #tpu.core_type<tc>, window_params = [{transform_indices = @transform_0, window_bounds = array<i64: 1, 4, 16, 16>}, {pipeline_mode = #tpu.pipeline_mode<synchronous>, transform_indices = @transform_1, window_bounds = array<i64: 8, 36>}, {pipeline_mode = #tpu.pipeline_mode<synchronous>, transform_indices = @transform_2, window_bounds = array<i64: 8, 1>}, {pipeline_mode = #tpu.pipeline_mode<synchronous>, transform_indices = @transform_3, window_bounds = array<i64: 8, 1>}, {pipeline_mode = #tpu.pipeline_mode<synchronous>, transform_indices = @transform_4, window_bounds = array<i64: 2, 8, 256>}]} {
    %c0_i32 = arith.constant 0 : i32
    %0 = arith.cmpi eq, %arg0, %c0_i32 : i32
    %1 = arith.extui %0 : i1 to i32
    %c0_i32_0 = arith.constant 0 : i32
    %2 = arith.cmpi ne, %1, %c0_i32_0 : i32
    scf.if %2 {
      %cst_24 = arith.constant 0.000000e+00 : f32
      %38 = vector.broadcast %cst_24 : f32 to vector<4x18x18xf32>
      %c0_25 = arith.constant 0 : index
      %c0_26 = arith.constant 0 : index
      %c0_27 = arith.constant 0 : index
      %39 = vector.load %arg6[%c0_25, %c0_26, %c0_27] : memref<4x18x18xf32, #tpu.memory_space<vmem>>, vector<4x18x18xf32>
      tpu.vector_store %arg6[%c0_25, %c0_26, %c0_27], %38 {strides = array<i32>} : memref<4x18x18xf32, #tpu.memory_space<vmem>>, vector<4x18x18xf32>,
      %cst_28 = arith.constant 0.000000e+00 : f32
      %40 = vector.broadcast %cst_28 : f32 to vector<8x1xf32>
      %c0_29 = arith.constant 0 : index
      %c0_30 = arith.constant 0 : index
      %41 = vector.load %arg7[%c0_29, %c0_30] : memref<8x1xf32, #tpu.memory_space<vmem>>, vector<8x1xf32>
      tpu.vector_store %arg7[%c0_29, %c0_30], %40 {strides = array<i32>} : memref<8x1xf32, #tpu.memory_space<vmem>>, vector<8x1xf32>,
      %cst_31 = arith.constant 0.000000e+00 : f32
      %42 = vector.broadcast %cst_31 : f32 to vector<8x1xf32>
      %c0_32 = arith.constant 0 : index
      %c0_33 = arith.constant 0 : index
      %43 = vector.load %arg8[%c0_32, %c0_33] : memref<8x1xf32, #tpu.memory_space<vmem>>, vector<8x1xf32>
      tpu.vector_store %arg8[%c0_32, %c0_33], %42 {strides = array<i32>} : memref<8x1xf32, #tpu.memory_space<vmem>>, vector<8x1xf32>,
    } else {
    }
    %c0 = arith.constant 0 : index
    %c0_1 = arith.constant 0 : index
    %c0_2 = arith.constant 0 : index
    %c0_3 = arith.constant 0 : index
    %3 = vector.load %arg1[%c0, %c0_1, %c0_2, %c0_3] : memref<1x4x16x16xf32, #tpu.memory_space<vmem>>, vector<1x4x16x16xf32>
    %4 = vector.shape_cast %3 : vector<1x4x16x16xf32> to vector<4x16x16xf32>
    %c0_4 = arith.constant 0 : index
    %c1 = arith.constant 1 : index
    %c1_5 = arith.constant 1 : index
    %5 = vector.load %arg6[%c0_4, %c1, %c1_5] : memref<4x18x18xf32, #tpu.memory_space<vmem>>, vector<4x16x16xf32>
    tpu.vector_store %arg6[%c0_4, %c1, %c1_5], %4 {strides = array<i32>} : memref<4x18x18xf32, #tpu.memory_space<vmem>>, vector<4x16x16xf32>,
    %c0_6 = arith.constant 0 : index
    %c0_7 = arith.constant 0 : index
    %c0_8 = arith.constant 0 : index
    %6 = vector.load %arg6[%c0_6, %c0_7, %c0_8] : memref<4x18x18xf32, #tpu.memory_space<vmem>>, vector<4x18x18xf32>
    %7 = vector.extract_strided_slice %6 {offsets = [0, 0, 0], sizes = [4, 16, 16], strides = [1, 1, 1]} : vector<4x18x18xf32> to vector<4x16x16xf32>
    %8 = vector.extract_strided_slice %6 {offsets = [0, 0, 1], sizes = [4, 16, 16], strides = [1, 1, 1]} : vector<4x18x18xf32> to vector<4x16x16xf32>
    %9 = vector.extract_strided_slice %6 {offsets = [0, 0, 2], sizes = [4, 16, 16], strides = [1, 1, 1]} : vector<4x18x18xf32> to vector<4x16x16xf32>
    %10 = vector.extract_strided_slice %6 {offsets = [0, 1, 0], sizes = [4, 16, 16], strides = [1, 1, 1]} : vector<4x18x18xf32> to vector<4x16x16xf32>
    %11 = vector.extract_strided_slice %6 {offsets = [0, 1, 1], sizes = [4, 16, 16], strides = [1, 1, 1]} : vector<4x18x18xf32> to vector<4x16x16xf32>
    %12 = vector.extract_strided_slice %6 {offsets = [0, 1, 2], sizes = [4, 16, 16], strides = [1, 1, 1]} : vector<4x18x18xf32> to vector<4x16x16xf32>
    %13 = vector.extract_strided_slice %6 {offsets = [0, 2, 0], sizes = [4, 16, 16], strides = [1, 1, 1]} : vector<4x18x18xf32> to vector<4x16x16xf32>
    %14 = vector.extract_strided_slice %6 {offsets = [0, 2, 1], sizes = [4, 16, 16], strides = [1, 1, 1]} : vector<4x18x18xf32> to vector<4x16x16xf32>
    %15 = vector.extract_strided_slice %6 {offsets = [0, 2, 2], sizes = [4, 16, 16], strides = [1, 1, 1]} : vector<4x18x18xf32> to vector<4x16x16xf32>
    %16 = tpu.concatenate %7, %8, %9, %10, %11, %12, %13, %14, %15 in 0 : vector<4x16x16xf32>, vector<4x16x16xf32>, vector<4x16x16xf32>, vector<4x16x16xf32>, vector<4x16x16xf32>, vector<4x16x16xf32>, vector<4x16x16xf32>, vector<4x16x16xf32>, vector<4x16x16xf32> -> vector<36x16x16xf32>
    %17 = vector.shape_cast %16 : vector<36x16x16xf32> to vector<36x256xf32>
    %c0_9 = arith.constant 0 : index
    %c0_10 = arith.constant 0 : index
    %18 = vector.load %arg2[%c0_9, %c0_10] : memref<8x36xf32, #tpu.memory_space<vmem>>, vector<8x36xf32>
    %cst = arith.constant dense<0.000000e+00> : vector<8x256xf32>
    %19 = tpu.matmul %18, %17, %cst {dimension_numbers = #tpu.dot_dimension_numbers<[1], [0], [0], [1], [0, 0, 1, 1], [], []>} : vector<8x36xf32>, vector<36x256xf32>, vector<8x256xf32> -> vector<8x256xf32>
    %20 = arith.index_cast %arg0 : i32 to index
    %c0_11 = arith.constant 0 : index
    %c0_12 = arith.constant 0 : index
    %21 = vector.load %arg5[%20, %c0_11, %c0_12] : memref<2x8x256xf32, #tpu.memory_space<vmem>>, vector<1x8x256xf32>
    %22 = vector.shape_cast %21 : vector<1x8x256xf32> to vector<8x256xf32>
    %23 = vector.shape_cast %19 : vector<8x256xf32> to vector<1x8x256xf32>
    tpu.vector_store %arg5[%20, %c0_11, %c0_12], %23 {strides = array<i32>} : memref<2x8x256xf32, #tpu.memory_space<vmem>>, vector<1x8x256xf32>,
    %c0_13 = arith.constant 0 : index
    %c0_14 = arith.constant 0 : index
    %24 = vector.load %arg7[%c0_13, %c0_14] : memref<8x1xf32, #tpu.memory_space<vmem>>, vector<8x1xf32>
    %cst_15 = arith.constant dense<0.000000e+00> : vector<8xf32>
    %25 = vector.multi_reduction <add>, %19, %cst_15 [1] : vector<8x256xf32> to vector<8xf32>
    %26 = vector.shape_cast %25 : vector<8xf32> to vector<8x1xf32>
    %27 = arith.addf %24, %26 : vector<8x1xf32>
    %c0_16 = arith.constant 0 : index
    %c0_17 = arith.constant 0 : index
    %28 = vector.load %arg7[%c0_16, %c0_17] : memref<8x1xf32, #tpu.memory_space<vmem>>, vector<8x1xf32>
    tpu.vector_store %arg7[%c0_16, %c0_17], %27 {strides = array<i32>} : memref<8x1xf32, #tpu.memory_space<vmem>>, vector<8x1xf32>,
    %c0_18 = arith.constant 0 : index
    %c0_19 = arith.constant 0 : index
    %29 = vector.load %arg8[%c0_18, %c0_19] : memref<8x1xf32, #tpu.memory_space<vmem>>, vector<8x1xf32>
    %30 = arith.mulf %19, %19 : vector<8x256xf32>
    %cst_20 = arith.constant dense<0.000000e+00> : vector<8xf32>
    %31 = vector.multi_reduction <add>, %30, %cst_20 [1] : vector<8x256xf32> to vector<8xf32>
    %32 = vector.shape_cast %31 : vector<8xf32> to vector<8x1xf32>
    %33 = arith.addf %29, %32 : vector<8x1xf32>
    %c0_21 = arith.constant 0 : index
    %c0_22 = arith.constant 0 : index
    %34 = vector.load %arg8[%c0_21, %c0_22] : memref<8x1xf32, #tpu.memory_space<vmem>>, vector<8x1xf32>
    tpu.vector_store %arg8[%c0_21, %c0_22], %33 {strides = array<i32>} : memref<8x1xf32, #tpu.memory_space<vmem>>, vector<8x1xf32>,
    %c1_i32 = arith.constant 1 : i32
    %35 = arith.cmpi eq, %arg0, %c1_i32 : i32
    %36 = arith.extui %35 : i1 to i32
    %c0_i32_23 = arith.constant 0 : i32
    %37 = arith.cmpi ne, %36, %c0_i32_23 : i32
    scf.if %37 {
      %c0_24 = arith.constant 0 : index
      %c0_25 = arith.constant 0 : index
      %38 = vector.load %arg7[%c0_24, %c0_25] : memref<8x1xf32, #tpu.memory_space<vmem>>, vector<8x1xf32>
      %cst_26 = arith.constant 0.001953125 : f32
      %39 = vector.broadcast %cst_26 : f32 to vector<8x1xf32>
      %40 = arith.mulf %38, %39 : vector<8x1xf32>
      %c0_27 = arith.constant 0 : index
      %c0_28 = arith.constant 0 : index
      %41 = vector.load %arg8[%c0_27, %c0_28] : memref<8x1xf32, #tpu.memory_space<vmem>>, vector<8x1xf32>
      %cst_29 = arith.constant 0.001953125 : f32
      %42 = vector.broadcast %cst_29 : f32 to vector<8x1xf32>
      %43 = arith.mulf %41, %42 : vector<8x1xf32>
      %44 = arith.mulf %40, %40 : vector<8x1xf32>
      %45 = arith.subf %43, %44 : vector<8x1xf32>
      %cst_30 = arith.constant 9.99999974E-6 : f32
      %46 = vector.broadcast %cst_30 : f32 to vector<8x1xf32>
      %47 = arith.addf %45, %46 : vector<8x1xf32>
      %48 = math.rsqrt %47 : vector<8x1xf32>
      %c0_31 = arith.constant 0 : index
      %c0_32 = arith.constant 0 : index
      %49 = vector.load %arg3[%c0_31, %c0_32] : memref<8x1xf32, #tpu.memory_space<vmem>>, vector<8x1xf32>
      %50 = arith.mulf %48, %49 : vector<8x1xf32>
      %c0_33 = arith.constant 0 : index
      %c0_34 = arith.constant 0 : index
      %51 = vector.load %arg4[%c0_33, %c0_34] : memref<8x1xf32, #tpu.memory_space<vmem>>, vector<8x1xf32>
      %52 = arith.mulf %40, %50 : vector<8x1xf32>
      %53 = arith.subf %51, %52 : vector<8x1xf32>
      %c0_35 = arith.constant 0 : index
      %c0_36 = arith.constant 0 : index
      %c0_37 = arith.constant 0 : index
      %54 = vector.load %arg5[%c0_35, %c0_36, %c0_37] : memref<2x8x256xf32, #tpu.memory_space<vmem>>, vector<2x8x256xf32>
      %55 = vector.shape_cast %50 : vector<8x1xf32> to vector<1x8x1xf32>
      %56 = vector.broadcast %55 : vector<1x8x1xf32> to vector<2x8x256xf32>
      %57 = arith.mulf %54, %56 : vector<2x8x256xf32>
      %58 = vector.shape_cast %53 : vector<8x1xf32> to vector<1x8x1xf32>
      %59 = vector.broadcast %58 : vector<1x8x1xf32> to vector<2x8x256xf32>
      %60 = arith.addf %57, %59 : vector<2x8x256xf32>
      %cst_38 = arith.constant 0.000000e+00 : f32
      %61 = vector.broadcast %cst_38 : f32 to vector<2x8x256xf32>
      %62 = arith.maximumf %60, %61 : vector<2x8x256xf32>
      %c0_39 = arith.constant 0 : index
      %c0_40 = arith.constant 0 : index
      %c0_41 = arith.constant 0 : index
      %63 = vector.load %arg5[%c0_39, %c0_40, %c0_41] : memref<2x8x256xf32, #tpu.memory_space<vmem>>, vector<2x8x256xf32>
      tpu.vector_store %arg5[%c0_39, %c0_40, %c0_41], %62 {strides = array<i32>} : memref<2x8x256xf32, #tpu.memory_space<vmem>>, vector<2x8x256xf32>,
    } else {
    }
    return
  }
  func.func @transform_0(%arg0: i32) -> (i32, i32, i32, i32) {
    %c0_i32 = arith.constant 0 : i32
    %c0_i32_0 = arith.constant 0 : i32
    %c0_i32_1 = arith.constant 0 : i32
    %c0_i32_2 = arith.constant 0 : i32
    return %arg0, %c0_i32, %c0_i32_0, %c0_i32_1 : i32, i32, i32, i32
  }
  func.func @transform_1(%arg0: i32) -> (i32, i32) {
    %c0_i32 = arith.constant 0 : i32
    %c0_i32_0 = arith.constant 0 : i32
    %c0_i32_1 = arith.constant 0 : i32
    return %c0_i32, %c0_i32_0 : i32, i32
  }
  func.func @transform_2(%arg0: i32) -> (i32, i32) {
    %c0_i32 = arith.constant 0 : i32
    %c0_i32_0 = arith.constant 0 : i32
    %c0_i32_1 = arith.constant 0 : i32
    return %c0_i32, %c0_i32_0 : i32, i32
  }
  func.func @transform_3(%arg0: i32) -> (i32, i32) {
    %c0_i32 = arith.constant 0 : i32
    %c0_i32_0 = arith.constant 0 : i32
    %c0_i32_1 = arith.constant 0 : i32
    return %c0_i32, %c0_i32_0 : i32, i32
  }
  func.func @transform_4(%arg0: i32) -> (i32, i32, i32) {
    %c0_i32 = arith.constant 0 : i32
    %c0_i32_0 = arith.constant 0 : i32
    %c0_i32_1 = arith.constant 0 : i32
    %c0_i32_2 = arith.constant 0 : i32
    return %c0_i32, %c0_i32_0, %c0_i32_1 : i32, i32, i32
  }
}

</mosaic_0001>

<llo_original>
// kernel: tpu_custom_call.1
$region0: #{tpu_custom_call.1}
  #allocation0 [shape = 'u32[]', space=smem, size = 0x4, offset = 0x4, fixed_abs, tag = 'smem constant byte address 0x4 - core index']
  #allocation1 [shape = 'u32[144,128]{1,0:T(1,128)}', space=vmem, size = 0x12000, scoped, tag = 'internal scratch']
  #allocation2 [shape = 'f32[4,18,18]{2,1,0:T(8,128)}', space=vmem, size = 0xc000, scoped, tag = 'scratch operand']
  #allocation3 [shape = 'f32[8,1]{1,0:T(8,128)}', space=vmem, size = 0x1000, scoped, tag = 'scratch operand']
  #allocation4 [shape = 'f32[8,1]{1,0:T(8,128)}', space=vmem, size = 0x1000, scoped, tag = 'scratch operand']
  %s0 = inlined_call_operand.hbm [shape: f32[2,4,16,16], index: 0, kind: input, shape index: {}]
  %s1 = inlined_call_operand.vmem [shape: f32[8,36], index: 1, kind: input, shape index: {}]
  %s2 = inlined_call_operand.vmem [shape: f32[8,1], index: 2, kind: input, shape index: {}]
  %s3 = inlined_call_operand.vmem [shape: f32[8,1], index: 3, kind: input, shape index: {}]
  %s4 = inlined_call_operand.hbm [shape: f32[2,8,256], index: 4, kind: output, shape index: {}]
  %s5 = sld [smem:[#allocation0]]
  $region61: #{tpu_custom_call.1} parent=0
    _
  %s7 = ssub.s32 1, %s5
  %s8 = scalar_select 0, %s7, %s5
  $region1: #{tpu_custom_call.1} parent=0
    #allocation5 [shape = 'u8[65536]{0}', space=vmem, size = 0x10000, scoped, tag = 'input window, operand 0']
    #allocation6 [shape = 's32[2]{0}', space=sflag, size = 0x8, scoped, tag = 'scoped memory for tpu_custom_call.1']
    #allocation7 [shape = 's32[2]{0}', space=sflag, size = 0x8, scoped, tag = 'scoped memory for tpu_custom_call.1']
    #allocation8 [shape = 'u8[16384]{0}', space=vmem, size = 0x4000, scoped, tag = 'output window, operand 0, single buffered']
    %9 = vsyncpa [#allocation6], 0
    %s10 = scalar_lea.sflag [#allocation6], 1
    %11 = vsyncpa %s10, 0
    %12 = vsyncpa [#allocation7], 0
    loop: start=0, step=1, limit=4
    $region2: #{tpu_custom_call.1} parent=1 // loop_pre_header
      _
    $region3: #{tpu_custom_call.1} parent=1 // loop_header
      %s14 = sphi 0, %s18
      %p15 = scmp.ge.s32.totalorder %s14, 4
      %s24 = sphi 0, %s26
      %s27 = sphi 0, %s24
      %s28 = sphi 0, %s27
      %s44 = sphi 0, %s28
      %s48 = sphi 0, %s48
      %s50 = sphi 0, %s48
      %s51 = sphi 0, %s50
      %s65 = sphi 0, %s51
      %s69 = sphi 0, %s69
      %s71 = sphi 0, %s69
      %s72 = sphi 0, %s71
      %s86 = sphi 0, %s72
      %s90 = sphi 0, %s90
      %s92 = sphi 0, %s90
      %s93 = sphi 0, %s92
      %s107 = sphi 0, %s93
      %s111 = sphi 0, %s111
      %s113 = sphi 0, %s111
      %s114 = sphi 0, %s113
      %s128 = sphi 0, %s114
    $region4: #{tpu_custom_call.1} parent=1 // loop_header_branch
      %17 = sbr.rel (%p15) target = $region8
    $region5: #{tpu_custom_call.1} parent=1 // loop_body
      %s19 = ssub.s32 %s14, 1
      %s20 = ssub.s32 %s14, 2
      %s21 = sadd.s32 %s14, 1
      %s22 = ssub.s32 %s14, %s21
      %p23 = scmp.eq.s32.totalorder %s22, 0
      %s25 = sadd.s32 %s24, 1
      %s26 = scalar_select %p23, %s24, %s25
      %p29 = pneg %p23
      %p30 = scmp.eq.s32.totalorder %s14, 1
      %p31 = por %p29, %p30
      %p32 = scmp.ne.s32.totalorder %s24, %s27
      %p33 = scmp.eq.s32.totalorder %s14, 0
      %p34 = por %p32, %p33
      %p35 = scmp.ne.s32.totalorder %s24, %s27
      %p36 = scmp.eq.s32.totalorder %s19, 1
      %p37 = por %p35, %p36
      %p38 = scmp.ne.s32.totalorder %s27, %s28
      %p39 = scmp.eq.s32.totalorder %s19, 0
      %p40 = por %p38, %p39
      %p41 = scmp.ne.s32.totalorder %s27, %s28
      %p42 = scmp.eq.s32.totalorder %s20, 1
      %p43 = por %p41, %p42
      %p45 = scmp.ne.s32.totalorder %s28, %s44
      %p46 = scmp.eq.s32.totalorder %s20, 0
      %p47 = por %p45, %p46
      %s49 = sadd.s32 %s48, 1
      %p52 = scmp.eq.s32.totalorder %s14, 1
      %p53 = scmp.ne.s32.totalorder %s48, %s50
      %p54 = scmp.eq.s32.totalorder %s14, 0
      %p55 = por %p53, %p54
      %p56 = scmp.ne.s32.totalorder %s48, %s50
      %p57 = scmp.eq.s32.totalorder %s19, 1
      %p58 = por %p56, %p57
      %p59 = scmp.ne.s32.totalorder %s50, %s51
      %p60 = scmp.eq.s32.totalorder %s19, 0
      %p61 = por %p59, %p60
      %p62 = scmp.ne.s32.totalorder %s50, %s51
      %p63 = scmp.eq.s32.totalorder %s20, 1
      %p64 = por %p62, %p63
      %p66 = scmp.ne.s32.totalorder %s51, %s65
      %p67 = scmp.eq.s32.totalorder %s20, 0
      %p68 = por %p66, %p67
      %s70 = sadd.s32 %s69, 1
      %p73 = scmp.eq.s32.totalorder %s14, 1
      %p74 = scmp.ne.s32.totalorder %s69, %s71
      %p75 = scmp.eq.s32.totalorder %s14, 0
      %p76 = por %p74, %p75
      %p77 = scmp.ne.s32.totalorder %s69, %s71
      %p78 = scmp.eq.s32.totalorder %s19, 1
      %p79 = por %p77, %p78
      %p80 = scmp.ne.s32.totalorder %s71, %s72
      %p81 = scmp.eq.s32.totalorder %s19, 0
      %p82 = por %p80, %p81
      %p83 = scmp.ne.s32.totalorder %s71, %s72
      %p84 = scmp.eq.s32.totalorder %s20, 1
      %p85 = por %p83, %p84
      %p87 = scmp.ne.s32.totalorder %s72, %s86
      %p88 = scmp.eq.s32.totalorder %s20, 0
      %p89 = por %p87, %p88
      %s91 = sadd.s32 %s90, 1
      %p94 = scmp.eq.s32.totalorder %s14, 1
      %p95 = scmp.ne.s32.totalorder %s90, %s92
      %p96 = scmp.eq.s32.totalorder %s14, 0
      %p97 = por %p95, %p96
      %p98 = scmp.ne.s32.totalorder %s90, %s92
      %p99 = scmp.eq.s32.totalorder %s19, 1
      %p100 = por %p98, %p99
      %p101 = scmp.ne.s32.totalorder %s92, %s93
      %p102 = scmp.eq.s32.totalorder %s19, 0
      %p103 = por %p101, %p102
      %p104 = scmp.ne.s32.totalorder %s92, %s93
      %p105 = scmp.eq.s32.totalorder %s20, 1
      %p106 = por %p104, %p105
      %p108 = scmp.ne.s32.totalorder %s93, %s107
      %p109 = scmp.eq.s32.totalorder %s20, 0
      %p110 = por %p108, %p109
      %s112 = sadd.s32 %s111, 1
      %p115 = scmp.eq.s32.totalorder %s14, 1
      %p116 = scmp.ne.s32.totalorder %s111, %s113
      %p117 = scmp.eq.s32.totalorder %s14, 0
      %p118 = por %p116, %p117
      %p119 = scmp.ne.s32.totalorder %s111, %s113
      %p120 = scmp.eq.s32.totalorder %s19, 1
      %p121 = por %p119, %p120
      %p122 = scmp.ne.s32.totalorder %s113, %s114
      %p123 = scmp.eq.s32.totalorder %s19, 0
      %p124 = por %p122, %p123
      %p125 = scmp.ne.s32.totalorder %s113, %s114
      %p126 = scmp.eq.s32.totalorder %s20, 1
      %p127 = por %p125, %p126
      %p129 = scmp.ne.s32.totalorder %s114, %s128
      %p130 = scmp.eq.s32.totalorder %s20, 0
      %p131 = por %p129, %p130
      %p132 = scmp.le.s32.totalorder 1, %s14
      %p133 = scmp.lt.s32.totalorder %s14, 3
      %p134 = pnand %p132, %p133
      %p135 = pneg %p134
      // Predicated region
      $region9: #{tpu_custom_call.1} parent=5 // pred_check
        _
      $region10: #{tpu_custom_call.1} parent=5 // pred_check_branch
        %137 = sbr.rel (%p134) target = $region12
      $region11: #{tpu_custom_call.1} parent=5 // pred_region
        %s138 = ssub.s32 %s14, 1
        // Predicated region
        $region13: #{tpu_custom_call.1} parent=11 // pred_check
          %p139 = pneg %p61
        $region14: #{tpu_custom_call.1} parent=11 // pred_check_branch
          %141 = sbr.rel (%p139) target = $region16
        $region15: #{tpu_custom_call.1} parent=11 // pred_region
          _
        $region16: #{tpu_custom_call.1} parent=11 // pred_fallthru
          _
        // Predicated region
        $region17: #{tpu_custom_call.1} parent=11 // pred_check
          %p142 = pneg %p82
        $region18: #{tpu_custom_call.1} parent=11 // pred_check_branch
          %144 = sbr.rel (%p142) target = $region20
        $region19: #{tpu_custom_call.1} parent=11 // pred_region
          _
        $region20: #{tpu_custom_call.1} parent=11 // pred_fallthru
          _
        // Predicated region
        $region21: #{tpu_custom_call.1} parent=11 // pred_check
          %p145 = pneg %p103
        $region22: #{tpu_custom_call.1} parent=11 // pred_check_branch
          %147 = sbr.rel (%p145) target = $region24
        $region23: #{tpu_custom_call.1} parent=11 // pred_region
          _
        $region24: #{tpu_custom_call.1} parent=11 // pred_fallthru
          _
      $region12: #{tpu_custom_call.1} parent=5 // pred_fallthru
        _
      %p148 = scmp.lt.s32.totalorder %s14, 2
      // Predicated region
      $region25: #{tpu_custom_call.1} parent=5 // pred_check
        %p149 = pneg %p148
      $region26: #{tpu_custom_call.1} parent=5 // pred_check_branch
        %151 = sbr.rel (%p149) target = $region28
      $region27: #{tpu_custom_call.1} parent=5 // pred_region
        // Predicated region
        $region29: #{tpu_custom_call.1} parent=27 // pred_check
          %p152 = pneg %p34
        $region30: #{tpu_custom_call.1} parent=27 // pred_check_branch
          %154 = sbr.rel (%p152) target = $region32
        $region31: #{tpu_custom_call.1} parent=27 // pred_region
          %s155 = sand.u32 %s24, 1
          %s156 = scalar_lea.sflag [#allocation6], %s155
          %s157 = sand.u32 %s24, 1
          %s158 = smul.addr %s157, 64
          %s159 = scalar_lea.vmem [#allocation5], %s158
          %s161 = ssub.s32 1024, 1024
          %162 = vsyncadd %s156, %s161
          %s163 = smul.addr %s14, 8
          %s164 = smul.addr %s163, 128
          %s165 = scalar_lea.hbm %s0, %s164
          %s166 = sshll.u32 %s159, 4
          %s167 = int_to_ptr.vmem [resolvable:$true] %s166
          %172 = dma.hbm_to_vmem [thread:$0]  %s165, 1024, %s167, %s156, 128, 128, 8
        $region32: #{tpu_custom_call.1} parent=27 // pred_fallthru
          _
      $region28: #{tpu_custom_call.1} parent=5 // pred_fallthru
        _
      %p173 = scmp.le.s32.totalorder 1, %s14
      %p174 = scmp.lt.s32.totalorder %s14, 3
      %p175 = pnand %p173, %p174
      %p176 = pneg %p175
      // Predicated region
      $region33: #{tpu_custom_call.1} parent=5 // pred_check
        _
      $region34: #{tpu_custom_call.1} parent=5 // pred_check_branch
        %178 = sbr.rel (%p175) target = $region36
      $region35: #{tpu_custom_call.1} parent=5 // pred_region
        %s179 = ssub.s32 %s14, 1
        %s180 = sand.u32 %s27, 1
        %s181 = scalar_lea.sflag [#allocation6], %s180
        %s182 = sand.u32 %s27, 1
        %s183 = smul.addr %s182, 64
        %s184 = scalar_lea.vmem [#allocation5], %s183
        // Predicated region
        $region37: #{tpu_custom_call.1} parent=35 // pred_check
          %p185 = pneg %p40
        $region38: #{tpu_custom_call.1} parent=35 // pred_check_branch
          %187 = sbr.rel (%p185) target = $region40
        $region39: #{tpu_custom_call.1} parent=35 // pred_region
          %188 = dma.done %s181, 1024
        $region40: #{tpu_custom_call.1} parent=35 // pred_fallthru
          _
        %s189 = sand.u32 %s27, 1
        %s190 = scalar_lea.sflag [#allocation6], %s189
        %s191 = sand.u32 %s27, 1
        %s192 = smul.addr %s191, 64
        %s193 = scalar_lea.vmem [#allocation5], %s192
        %p194 = pneg %p40
        %p195 = pneg %p37
        %p196 = pneg %p61
        %p197 = pneg %p58
        %p198 = pneg %p82
        %p199 = pneg %p79
        %p200 = pneg %p103
        %p201 = pneg %p100
        %p202 = pneg %p124
        %p203 = pneg %p121
        %p204 = scmp.eq.s32.totalorder %s19, 0
        // Predicated region
        $region41: #{tpu_custom_call.1} parent=35 // pred_check
          %p205 = pneg %p204
        $region42: #{tpu_custom_call.1} parent=35 // pred_check_branch
          %207 = sbr.rel (%p205) target = $region44
        $region43: #{tpu_custom_call.1} parent=35 // pred_region
          %vm208 = vcmask 146432
          %209 = vst.msk [vmem:[#allocation2] sm:$0xff] %vm208, 0.0
          %210 = vst.msk [vmem:[#allocation2 + $0x8] sm:$0xff] %vm208, 0.0
          %vm211 = vcmask 140288
          %212 = vst.msk [vmem:[#allocation2 + $0x10] sm:$0x3] %vm211, 0.0
          %213 = vst.msk [vmem:[#allocation2 + $0x18] sm:$0xff] %vm208, 0.0
          %214 = vst.msk [vmem:[#allocation2 + $0x20] sm:$0xff] %vm208, 0.0
          %215 = vst.msk [vmem:[#allocation2 + $0x28] sm:$0x3] %vm211, 0.0
          %216 = vst.msk [vmem:[#allocation2 + $0x30] sm:$0xff] %vm208, 0.0
          %217 = vst.msk [vmem:[#allocation2 + $0x38] sm:$0xff] %vm208, 0.0
          %218 = vst.msk [vmem:[#allocation2 + $0x40] sm:$0x3] %vm211, 0.0
          %219 = vst.msk [vmem:[#allocation2 + $0x48] sm:$0xff] %vm208, 0.0
          %220 = vst.msk [vmem:[#allocation2 + $0x50] sm:$0xff] %vm208, 0.0
          %221 = vst.msk [vmem:[#allocation2 + $0x58] sm:$0x3] %vm211, 0.0
          %vm222 = vcmask 7168
          %223 = vst.msk [vmem:[#allocation3] sm:$0xff] %vm222, 0.0
          %224 = vst.msk [vmem:[#allocation4] sm:$0xff] %vm222, 0.0
        $region44: #{tpu_custom_call.1} parent=35 // pred_fallthru
          _
        %v225 = vld [vmem:[%s184] sm:$0xff]
        %v226 = vld [vmem:[%s184 + $0x8] sm:$0xff]
        %v227 = vld [vmem:[%s184 + $0x10] sm:$0xff]
        %v228 = vld [vmem:[%s184 + $0x18] sm:$0xff]
        %v229 = vld [vmem:[%s184 + $0x20] sm:$0xff]
        %v230 = vld [vmem:[%s184 + $0x28] sm:$0xff]
        %v231 = vld [vmem:[%s184 + $0x30] sm:$0xff]
        %v232 = vld [vmem:[%s184 + $0x38] sm:$0xff]
        %241 = vrot.lane.b32.xlu0 %v225, 1
        %v242 = vpop.permute.xlu0 %241
        %243 = vrot.lane.b32.xlu0 %v226, 1
        %v244 = vpop.permute.xlu0 %243
        %245 = vrot.lane.b32.xlu0 %v227, 1
        %v246 = vpop.permute.xlu0 %245
        %247 = vrot.lane.b32.xlu0 %v228, 1
        %v248 = vpop.permute.xlu0 %247
        %249 = vrot.lane.b32.xlu0 %v229, 1
        %v250 = vpop.permute.xlu0 %249
        %251 = vrot.lane.b32.xlu0 %v230, 1
        %v252 = vpop.permute.xlu0 %251
        %253 = vrot.lane.b32.xlu0 %v231, 1
        %v254 = vpop.permute.xlu0 %253
        %255 = vrot.lane.b32.xlu0 %v232, 1
        %v256 = vpop.permute.xlu0 %255
        %vm265 = vcmask 138248
        %266 = vst.msk [vmem:[#allocation2 + $0x1] sm:$0xff] %vm265, %v242
        %267 = vst.msk [vmem:[#allocation2 + $0x9] sm:$0xff] %vm265, %v244
        %268 = vst.msk [vmem:[#allocation2 + $0x19] sm:$0xff] %vm265, %v246
        %269 = vst.msk [vmem:[#allocation2 + $0x21] sm:$0xff] %vm265, %v248
        %270 = vst.msk [vmem:[#allocation2 + $0x31] sm:$0xff] %vm265, %v250
        %271 = vst.msk [vmem:[#allocation2 + $0x39] sm:$0xff] %vm265, %v252
        %272 = vst.msk [vmem:[#allocation2 + $0x49] sm:$0xff] %vm265, %v254
        %273 = vst.msk [vmem:[#allocation2 + $0x51] sm:$0xff] %vm265, %v256
        %v274 = vld [vmem:[#allocation2] sm:$0xff]
        %v275 = vld [vmem:[#allocation2 + $0x8] sm:$0xff]
        %v276 = vld [vmem:[#allocation2 + $0x10] sm:$0x3]
        %v277 = vld [vmem:[#allocation2 + $0x18] sm:$0xff]
        %v278 = vld [vmem:[#allocation2 + $0x20] sm:$0xff]
        %v279 = vld [vmem:[#allocation2 + $0x28] sm:$0x3]
        %v280 = vld [vmem:[#allocation2 + $0x30] sm:$0xff]
        %v281 = vld [vmem:[#allocation2 + $0x38] sm:$0xff]
        %v282 = vld [vmem:[#allocation2 + $0x40] sm:$0x3]
        %v283 = vld [vmem:[#allocation2 + $0x48] sm:$0xff]
        %v284 = vld [vmem:[#allocation2 + $0x50] sm:$0xff]
        %v285 = vld [vmem:[#allocation2 + $0x58] sm:$0x3]
        %294 = vrot.lane.b32.xlu0 %v274, 127
        %v295 = vpop.permute.xlu0 %294
        %296 = vrot.lane.b32.xlu0 %v275, 127
        %v297 = vpop.permute.xlu0 %296
        %298 = vrot.lane.b32.xlu0 %v277, 127
        %v299 = vpop.permute.xlu0 %298
        %300 = vrot.lane.b32.xlu0 %v278, 127
        %v301 = vpop.permute.xlu0 %300
        %302 = vrot.lane.b32.xlu0 %v280, 127
        %v303 = vpop.permute.xlu0 %302
        %304 = vrot.lane.b32.xlu0 %v281, 127
        %v305 = vpop.permute.xlu0 %304
        %306 = vrot.lane.b32.xlu0 %v283, 127
        %v307 = vpop.permute.xlu0 %306
        %308 = vrot.lane.b32.xlu0 %v284, 127
        %v309 = vpop.permute.xlu0 %308
        %318 = vrot.lane.b32.xlu0 %v274, 126
        %v319 = vpop.permute.xlu0 %318
        %320 = vrot.lane.b32.xlu0 %v275, 126
        %v321 = vpop.permute.xlu0 %320
        %322 = vrot.lane.b32.xlu0 %v277, 126
        %v323 = vpop.permute.xlu0 %322
        %324 = vrot.lane.b32.xlu0 %v278, 126
        %v325 = vpop.permute.xlu0 %324
        %326 = vrot.lane.b32.xlu0 %v280, 126
        %v327 = vpop.permute.xlu0 %326
        %328 = vrot.lane.b32.xlu0 %v281, 126
        %v329 = vpop.permute.xlu0 %328
        %330 = vrot.lane.b32.xlu0 %v283, 126
        %v331 = vpop.permute.xlu0 %330
        %332 = vrot.lane.b32.xlu0 %v284, 126
        %v333 = vpop.permute.xlu0 %332
        %vm346 = vcmask 1046528
        %v347 = vrot.slane %v274, 1
        %v348 = vrot.slane %v275, 1
        %v349 = vsel %vm346, %v347, %v348
        %v350 = vrot.slane %v276, 1
        %v351 = vsel %vm346, %v348, %v350
        %v352 = vrot.slane %v277, 1
        %v353 = vrot.slane %v278, 1
        %v354 = vsel %vm346, %v352, %v353
        %v355 = vrot.slane %v279, 1
        %v356 = vsel %vm346, %v353, %v355
        %v357 = vrot.slane %v280, 1
        %v358 = vrot.slane %v281, 1
        %v359 = vsel %vm346, %v357, %v358
        %v360 = vrot.slane %v282, 1
        %v361 = vsel %vm346, %v358, %v360
        %v362 = vrot.slane %v283, 1
        %v363 = vrot.slane %v284, 1
        %v364 = vsel %vm346, %v362, %v363
        %v365 = vrot.slane %v285, 1
        %v366 = vsel %vm346, %v363, %v365
        %375 = vrot.lane.b32.xlu0 %v349, 127
        %v376 = vpop.permute.xlu0 %375
        %377 = vrot.lane.b32.xlu0 %v351, 127
        %v378 = vpop.permute.xlu0 %377
        %379 = vrot.lane.b32.xlu0 %v354, 127
        %v380 = vpop.permute.xlu0 %379
        %381 = vrot.lane.b32.xlu0 %v356, 127
        %v382 = vpop.permute.xlu0 %381
        %383 = vrot.lane.b32.xlu0 %v359, 127
        %v384 = vpop.permute.xlu0 %383
        %385 = vrot.lane.b32.xlu0 %v361, 127
        %v386 = vpop.permute.xlu0 %385
        %387 = vrot.lane.b32.xlu0 %v364, 127
        %v388 = vpop.permute.xlu0 %387
        %389 = vrot.lane.b32.xlu0 %v366, 127
        %v390 = vpop.permute.xlu0 %389
        %399 = vrot.lane.b32.xlu0 %v349, 126
        %v400 = vpop.permute.xlu0 %399
        %401 = vrot.lane.b32.xlu0 %v351, 126
        %v402 = vpop.permute.xlu0 %401
        %403 = vrot.lane.b32.xlu0 %v354, 126
        %v404 = vpop.permute.xlu0 %403
        %405 = vrot.lane.b32.xlu0 %v356, 126
        %v406 = vpop.permute.xlu0 %405
        %407 = vrot.lane.b32.xlu0 %v359, 126
        %v408 = vpop.permute.xlu0 %407
        %409 = vrot.lane.b32.xlu0 %v361, 126
        %v410 = vpop.permute.xlu0 %409
        %411 = vrot.lane.b32.xlu0 %v364, 126
        %v412 = vpop.permute.xlu0 %411
        %413 = vrot.lane.b32.xlu0 %v366, 126
        %v414 = vpop.permute.xlu0 %413
        %vm423 = vcmask 1045504
        %v424 = vrot.slane %v274, 2
        %v425 = vrot.slane %v275, 2
        %v426 = vsel %vm423, %v424, %v425
        %v427 = vrot.slane %v276, 2
        %v428 = vsel %vm423, %v425, %v427
        %v429 = vrot.slane %v277, 2
        %v430 = vrot.slane %v278, 2
        %v431 = vsel %vm423, %v429, %v430
        %v432 = vrot.slane %v279, 2
        %v433 = vsel %vm423, %v430, %v432
        %v434 = vrot.slane %v280, 2
        %v435 = vrot.slane %v281, 2
        %v436 = vsel %vm423, %v434, %v435
        %v437 = vrot.slane %v282, 2
        %v438 = vsel %vm423, %v435, %v437
        %v439 = vrot.slane %v283, 2
        %v440 = vrot.slane %v284, 2
        %v441 = vsel %vm423, %v439, %v440
        %v442 = vrot.slane %v285, 2
        %v443 = vsel %vm423, %v440, %v442
        %452 = vrot.lane.b32.xlu0 %v426, 127
        %v453 = vpop.permute.xlu0 %452
        %454 = vrot.lane.b32.xlu0 %v428, 127
        %v455 = vpop.permute.xlu0 %454
        %456 = vrot.lane.b32.xlu0 %v431, 127
        %v457 = vpop.permute.xlu0 %456
        %458 = vrot.lane.b32.xlu0 %v433, 127
        %v459 = vpop.permute.xlu0 %458
        %460 = vrot.lane.b32.xlu0 %v436, 127
        %v461 = vpop.permute.xlu0 %460
        %462 = vrot.lane.b32.xlu0 %v438, 127
        %v463 = vpop.permute.xlu0 %462
        %464 = vrot.lane.b32.xlu0 %v441, 127
        %v465 = vpop.permute.xlu0 %464
        %466 = vrot.lane.b32.xlu0 %v443, 127
        %v467 = vpop.permute.xlu0 %466
        %476 = vrot.lane.b32.xlu0 %v426, 126
        %v477 = vpop.permute.xlu0 %476
        %478 = vrot.lane.b32.xlu0 %v428, 126
        %v479 = vpop.permute.xlu0 %478
        %480 = vrot.lane.b32.xlu0 %v431, 126
        %v481 = vpop.permute.xlu0 %480
        %482 = vrot.lane.b32.xlu0 %v433, 126
        %v483 = vpop.permute.xlu0 %482
        %484 = vrot.lane.b32.xlu0 %v436, 126
        %v485 = vpop.permute.xlu0 %484
        %486 = vrot.lane.b32.xlu0 %v438, 126
        %v487 = vpop.permute.xlu0 %486
        %488 = vrot.lane.b32.xlu0 %v441, 126
        %v489 = vpop.permute.xlu0 %488
        %490 = vrot.lane.b32.xlu0 %v443, 126
        %v491 = vpop.permute.xlu0 %490
        %v500 = vcombine.low %v274, %v280
        %v501 = vcombine.high %v274, %v280
        %v503 = vunpack.c.l.s4 1983009808
        %v504 = vunpack.c.0.s8 %v503
        %v505 = vlaneseq
        %v506 = vshrl.u32 %v505, 7
        %v507 = vsub.s32 %v504, %v506
        %v508 = vrot.slane %v500, %v507
        %v510 = vunpack.c.l.s4 1983009808
        %v511 = vunpack.c.0.s8 %v510
        %v512 = vlaneseq
        %v513 = vshrl.u32 %v512, 7
        %v514 = vsub.s32 %v511, %v513
        %v515 = vrot.slane %v501, %v514
        %v516 = vcombine.low %v277, %v283
        %v517 = vcombine.high %v277, %v283
        %v519 = vunpack.c.l.s4 1983009808
        %v520 = vunpack.c.0.s8 %v519
        %v521 = vlaneseq
        %v522 = vshrl.u32 %v521, 7
        %v523 = vsub.s32 %v520, %v522
        %v524 = vrot.slane %v516, %v523
        %v526 = vunpack.c.l.s4 1983009808
        %v527 = vunpack.c.0.s8 %v526
        %v528 = vlaneseq
        %v529 = vshrl.u32 %v528, 7
        %v530 = vsub.s32 %v527, %v529
        %v531 = vrot.slane %v517, %v530
        %v532 = vcombine.low %v295, %v303
        %v533 = vcombine.high %v295, %v303
        %v535 = vunpack.c.l.s4 1983009808
        %v536 = vunpack.c.0.s8 %v535
        %v537 = vlaneseq
        %v538 = vshrl.u32 %v537, 7
        %v539 = vsub.s32 %v536, %v538
        %v540 = vrot.slane %v532, %v539
        %v542 = vunpack.c.l.s4 1983009808
        %v543 = vunpack.c.0.s8 %v542
        %v544 = vlaneseq
        %v545 = vshrl.u32 %v544, 7
        %v546 = vsub.s32 %v543, %v545
        %v547 = vrot.slane %v533, %v546
        %v548 = vcombine.low %v299, %v307
        %v549 = vcombine.high %v299, %v307
        %v551 = vunpack.c.l.s4 1983009808
        %v552 = vunpack.c.0.s8 %v551
        %v553 = vlaneseq
        %v554 = vshrl.u32 %v553, 7
        %v555 = vsub.s32 %v552, %v554
        %v556 = vrot.slane %v548, %v555
        %v558 = vunpack.c.l.s4 1983009808
        %v559 = vunpack.c.0.s8 %v558
        %v560 = vlaneseq
        %v561 = vshrl.u32 %v560, 7
        %v562 = vsub.s32 %v559, %v561
        %v563 = vrot.slane %v549, %v562
        %v564 = vcombine.low %v508, %v524
        %v565 = vcombine.high %v508, %v524
        %v567 = vunpack.c.l.s4 1934713408
        %v568 = vunpack.c.0.s8 %v567
        %v569 = vlaneseq
        %v570 = vshrl.u32 %v569, 7
        %v571 = vsub.s32 %v568, %v570
        %v572 = vrot.slane %v564, %v571
        %v574 = vunpack.c.l.s4 1934713408
        %v575 = vunpack.c.0.s8 %v574
        %v576 = vlaneseq
        %v577 = vshrl.u32 %v576, 7
        %v578 = vsub.s32 %v575, %v577
        %v579 = vrot.slane %v565, %v578
        %v580 = vcombine.low %v515, %v531
        %v581 = vcombine.high %v515, %v531
        %v583 = vunpack.c.l.s4 1934713408
        %v584 = vunpack.c.0.s8 %v583
        %v585 = vlaneseq
        %v586 = vshrl.u32 %v585, 7
        %v587 = vsub.s32 %v584, %v586
        %v588 = vrot.slane %v580, %v587
        %v590 = vunpack.c.l.s4 1934713408
        %v591 = vunpack.c.0.s8 %v590
        %v592 = vlaneseq
        %v593 = vshrl.u32 %v592, 7
        %v594 = vsub.s32 %v591, %v593
        %v595 = vrot.slane %v581, %v594
        %v596 = vcombine.low %v540, %v556
        %v597 = vcombine.high %v540, %v556
        %v599 = vunpack.c.l.s4 1934713408
        %v600 = vunpack.c.0.s8 %v599
        %v601 = vlaneseq
        %v602 = vshrl.u32 %v601, 7
        %v603 = vsub.s32 %v600, %v602
        %v604 = vrot.slane %v596, %v603
        %v606 = vunpack.c.l.s4 1934713408
        %v607 = vunpack.c.0.s8 %v606
        %v608 = vlaneseq
        %v609 = vshrl.u32 %v608, 7
        %v610 = vsub.s32 %v607, %v609
        %v611 = vrot.slane %v597, %v610
        %v612 = vcombine.low %v547, %v563
        %v613 = vcombine.high %v547, %v563
        %v615 = vunpack.c.l.s4 1934713408
        %v616 = vunpack.c.0.s8 %v615
        %v617 = vlaneseq
        %v618 = vshrl.u32 %v617, 7
        %v619 = vsub.s32 %v616, %v618
        %v620 = vrot.slane %v612, %v619
        %v622 = vunpack.c.l.s4 1934713408
        %v623 = vunpack.c.0.s8 %v622
        %v624 = vlaneseq
        %v625 = vshrl.u32 %v624, 7
        %v626 = vsub.s32 %v623, %v625
        %v627 = vrot.slane %v613, %v626
        %v628 = vcombine.low %v572, %v604
        %v629 = vcombine.high %v572, %v604
        %v630 = vcombine.low %v579, %v611
        %v631 = vcombine.high %v579, %v611
        %v632 = vcombine.low %v588, %v620
        %v633 = vcombine.high %v588, %v620
        %v634 = vcombine.low %v595, %v627
        %v635 = vcombine.high %v595, %v627
        %v636 = vcombine.low %v319, %v327
        %v637 = vcombine.high %v319, %v327
        %v639 = vunpack.c.l.s4 1983009808
        %v640 = vunpack.c.0.s8 %v639
        %v641 = vlaneseq
        %v642 = vshrl.u32 %v641, 7
        %v643 = vsub.s32 %v640, %v642
        %v644 = vrot.slane %v636, %v643
        %v646 = vunpack.c.l.s4 1983009808
        %v647 = vunpack.c.0.s8 %v646
        %v648 = vlaneseq
        %v649 = vshrl.u32 %v648, 7
        %v650 = vsub.s32 %v647, %v649
        %v651 = vrot.slane %v637, %v650
        %v652 = vcombine.low %v323, %v331
        %v653 = vcombine.high %v323, %v331
        %v655 = vunpack.c.l.s4 1983009808
        %v656 = vunpack.c.0.s8 %v655
        %v657 = vlaneseq
        %v658 = vshrl.u32 %v657, 7
        %v659 = vsub.s32 %v656, %v658
        %v660 = vrot.slane %v652, %v659
        %v662 = vunpack.c.l.s4 1983009808
        %v663 = vunpack.c.0.s8 %v662
        %v664 = vlaneseq
        %v665 = vshrl.u32 %v664, 7
        %v666 = vsub.s32 %v663, %v665
        %v667 = vrot.slane %v653, %v666
        %v668 = vcombine.low %v349, %v359
        %v669 = vcombine.high %v349, %v359
        %v671 = vunpack.c.l.s4 1983009808
        %v672 = vunpack.c.0.s8 %v671
        %v673 = vlaneseq
        %v674 = vshrl.u32 %v673, 7
        %v675 = vsub.s32 %v672, %v674
        %v676 = vrot.slane %v668, %v675
        %v678 = vunpack.c.l.s4 1983009808
        %v679 = vunpack.c.0.s8 %v678
        %v680 = vlaneseq
        %v681 = vshrl.u32 %v680, 7
        %v682 = vsub.s32 %v679, %v681
        %v683 = vrot.slane %v669, %v682
        %v684 = vcombine.low %v354, %v364
        %v685 = vcombine.high %v354, %v364
        %v687 = vunpack.c.l.s4 1983009808
        %v688 = vunpack.c.0.s8 %v687
        %v689 = vlaneseq
        %v690 = vshrl.u32 %v689, 7
        %v691 = vsub.s32 %v688, %v690
        %v692 = vrot.slane %v684, %v691
        %v694 = vunpack.c.l.s4 1983009808
        %v695 = vunpack.c.0.s8 %v694
        %v696 = vlaneseq
        %v697 = vshrl.u32 %v696, 7
        %v698 = vsub.s32 %v695, %v697
        %v699 = vrot.slane %v685, %v698
        %v700 = vcombine.low %v644, %v660
        %v701 = vcombine.high %v644, %v660
        %v703 = vunpack.c.l.s4 1934713408
        %v704 = vunpack.c.0.s8 %v703
        %v705 = vlaneseq
        %v706 = vshrl.u32 %v705, 7
        %v707 = vsub.s32 %v704, %v706
        %v708 = vrot.slane %v700, %v707
        %v710 = vunpack.c.l.s4 1934713408
        %v711 = vunpack.c.0.s8 %v710
        %v712 = vlaneseq
        %v713 = vshrl.u32 %v712, 7
        %v714 = vsub.s32 %v711, %v713
        %v715 = vrot.slane %v701, %v714
        %v716 = vcombine.low %v651, %v667
        %v717 = vcombine.high %v651, %v667
        %v719 = vunpack.c.l.s4 1934713408
        %v720 = vunpack.c.0.s8 %v719
        %v721 = vlaneseq
        %v722 = vshrl.u32 %v721, 7
        %v723 = vsub.s32 %v720, %v722
        %v724 = vrot.slane %v716, %v723
        %v726 = vunpack.c.l.s4 1934713408
        %v727 = vunpack.c.0.s8 %v726
        %v728 = vlaneseq
        %v729 = vshrl.u32 %v728, 7
        %v730 = vsub.s32 %v727, %v729
        %v731 = vrot.slane %v717, %v730
        %v732 = vcombine.low %v676, %v692
        %v733 = vcombine.high %v676, %v692
        %v735 = vunpack.c.l.s4 1934713408
        %v736 = vunpack.c.0.s8 %v735
        %v737 = vlaneseq
        %v738 = vshrl.u32 %v737, 7
        %v739 = vsub.s32 %v736, %v738
        %v740 = vrot.slane %v732, %v739
        %v742 = vunpack.c.l.s4 1934713408
        %v743 = vunpack.c.0.s8 %v742
        %v744 = vlaneseq
        %v745 = vshrl.u32 %v744, 7
        %v746 = vsub.s32 %v743, %v745
        %v747 = vrot.slane %v733, %v746
        %v748 = vcombine.low %v683, %v699
        %v749 = vcombine.high %v683, %v699
        %v751 = vunpack.c.l.s4 1934713408
        %v752 = vunpack.c.0.s8 %v751
        %v753 = vlaneseq
        %v754 = vshrl.u32 %v753, 7
        %v755 = vsub.s32 %v752, %v754
        %v756 = vrot.slane %v748, %v755
        %v758 = vunpack.c.l.s4 1934713408
        %v759 = vunpack.c.0.s8 %v758
        %v760 = vlaneseq
        %v761 = vshrl.u32 %v760, 7
        %v762 = vsub.s32 %v759, %v761
        %v763 = vrot.slane %v749, %v762
        %v764 = vcombine.low %v708, %v740
        %v765 = vcombine.high %v708, %v740
        %v766 = vcombine.low %v715, %v747
        %v767 = vcombine.high %v715, %v747
        %v768 = vcombine.low %v724, %v756
        %v769 = vcombine.high %v724, %v756
        %v770 = vcombine.low %v731, %v763
        %v771 = vcombine.high %v731, %v763
        %v772 = vcombine.low %v376, %v384
        %v773 = vcombine.high %v376, %v384
        %v775 = vunpack.c.l.s4 1983009808
        %v776 = vunpack.c.0.s8 %v775
        %v777 = vlaneseq
        %v778 = vshrl.u32 %v777, 7
        %v779 = vsub.s32 %v776, %v778
        %v780 = vrot.slane %v772, %v779
        %v782 = vunpack.c.l.s4 1983009808
        %v783 = vunpack.c.0.s8 %v782
        %v784 = vlaneseq
        %v785 = vshrl.u32 %v784, 7
        %v786 = vsub.s32 %v783, %v785
        %v787 = vrot.slane %v773, %v786
        %v788 = vcombine.low %v380, %v388
        %v789 = vcombine.high %v380, %v388
        %v791 = vunpack.c.l.s4 1983009808
        %v792 = vunpack.c.0.s8 %v791
        %v793 = vlaneseq
        %v794 = vshrl.u32 %v793, 7
        %v795 = vsub.s32 %v792, %v794
        %v796 = vrot.slane %v788, %v795
        %v798 = vunpack.c.l.s4 1983009808
        %v799 = vunpack.c.0.s8 %v798
        %v800 = vlaneseq
        %v801 = vshrl.u32 %v800, 7
        %v802 = vsub.s32 %v799, %v801
        %v803 = vrot.slane %v789, %v802
        %v804 = vcombine.low %v400, %v408
        %v805 = vcombine.high %v400, %v408
        %v807 = vunpack.c.l.s4 1983009808
        %v808 = vunpack.c.0.s8 %v807
        %v809 = vlaneseq
        %v810 = vshrl.u32 %v809, 7
        %v811 = vsub.s32 %v808, %v810
        %v812 = vrot.slane %v804, %v811
        %v814 = vunpack.c.l.s4 1983009808
        %v815 = vunpack.c.0.s8 %v814
        %v816 = vlaneseq
        %v817 = vshrl.u32 %v816, 7
        %v818 = vsub.s32 %v815, %v817
        %v819 = vrot.slane %v805, %v818
        %v820 = vcombine.low %v404, %v412
        %v821 = vcombine.high %v404, %v412
        %v823 = vunpack.c.l.s4 1983009808
        %v824 = vunpack.c.0.s8 %v823
        %v825 = vlaneseq
        %v826 = vshrl.u32 %v825, 7
        %v827 = vsub.s32 %v824, %v826
        %v828 = vrot.slane %v820, %v827
        %v830 = vunpack.c.l.s4 1983009808
        %v831 = vunpack.c.0.s8 %v830
        %v832 = vlaneseq
        %v833 = vshrl.u32 %v832, 7
        %v834 = vsub.s32 %v831, %v833
        %v835 = vrot.slane %v821, %v834
        %v836 = vcombine.low %v780, %v796
        %v837 = vcombine.high %v780, %v796
        %v839 = vunpack.c.l.s4 1934713408
        %v840 = vunpack.c.0.s8 %v839
        %v841 = vlaneseq
        %v842 = vshrl.u32 %v841, 7
        %v843 = vsub.s32 %v840, %v842
        %v844 = vrot.slane %v836, %v843
        %v846 = vunpack.c.l.s4 1934713408
        %v847 = vunpack.c.0.s8 %v846
        %v848 = vlaneseq
        %v849 = vshrl.u32 %v848, 7
        %v850 = vsub.s32 %v847, %v849
        %v851 = vrot.slane %v837, %v850
        %v852 = vcombine.low %v787, %v803
        %v853 = vcombine.high %v787, %v803
        %v855 = vunpack.c.l.s4 1934713408
        %v856 = vunpack.c.0.s8 %v855
        %v857 = vlaneseq
        %v858 = vshrl.u32 %v857, 7
        %v859 = vsub.s32 %v856, %v858
        %v860 = vrot.slane %v852, %v859
        %v862 = vunpack.c.l.s4 1934713408
        %v863 = vunpack.c.0.s8 %v862
        %v864 = vlaneseq
        %v865 = vshrl.u32 %v864, 7
        %v866 = vsub.s32 %v863, %v865
        %v867 = vrot.slane %v853, %v866
        %v868 = vcombine.low %v812, %v828
        %v869 = vcombine.high %v812, %v828
        %v871 = vunpack.c.l.s4 1934713408
        %v872 = vunpack.c.0.s8 %v871
        %v873 = vlaneseq
        %v874 = vshrl.u32 %v873, 7
        %v875 = vsub.s32 %v872, %v874
        %v876 = vrot.slane %v868, %v875
        %v878 = vunpack.c.l.s4 1934713408
        %v879 = vunpack.c.0.s8 %v878
        %v880 = vlaneseq
        %v881 = vshrl.u32 %v880, 7
        %v882 = vsub.s32 %v879, %v881
        %v883 = vrot.slane %v869, %v882
        %v884 = vcombine.low %v819, %v835
        %v885 = vcombine.high %v819, %v835
        %v887 = vunpack.c.l.s4 1934713408
        %v888 = vunpack.c.0.s8 %v887
        %v889 = vlaneseq
        %v890 = vshrl.u32 %v889, 7
        %v891 = vsub.s32 %v888, %v890
        %v892 = vrot.slane %v884, %v891
        %v894 = vunpack.c.l.s4 1934713408
        %v895 = vunpack.c.0.s8 %v894
        %v896 = vlaneseq
        %v897 = vshrl.u32 %v896, 7
        %v898 = vsub.s32 %v895, %v897
        %v899 = vrot.slane %v885, %v898
        %v900 = vcombine.low %v844, %v876
        %v901 = vcombine.high %v844, %v876
        %v902 = vcombine.low %v851, %v883
        %v903 = vcombine.high %v851, %v883
        %v904 = vcombine.low %v860, %v892
        %v905 = vcombine.high %v860, %v892
        %v906 = vcombine.low %v867, %v899
        %v907 = vcombine.high %v867, %v899
        %v908 = vcombine.low %v426, %v436
        %v909 = vcombine.high %v426, %v436
        %v911 = vunpack.c.l.s4 1983009808
        %v912 = vunpack.c.0.s8 %v911
        %v913 = vlaneseq
        %v914 = vshrl.u32 %v913, 7
        %v915 = vsub.s32 %v912, %v914
        %v916 = vrot.slane %v908, %v915
        %v918 = vunpack.c.l.s4 1983009808
        %v919 = vunpack.c.0.s8 %v918
        %v920 = vlaneseq
        %v921 = vshrl.u32 %v920, 7
        %v922 = vsub.s32 %v919, %v921
        %v923 = vrot.slane %v909, %v922
        %v924 = vcombine.low %v431, %v441
        %v925 = vcombine.high %v431, %v441
        %v927 = vunpack.c.l.s4 1983009808
        %v928 = vunpack.c.0.s8 %v927
        %v929 = vlaneseq
        %v930 = vshrl.u32 %v929, 7
        %v931 = vsub.s32 %v928, %v930
        %v932 = vrot.slane %v924, %v931
        %v934 = vunpack.c.l.s4 1983009808
        %v935 = vunpack.c.0.s8 %v934
        %v936 = vlaneseq
        %v937 = vshrl.u32 %v936, 7
        %v938 = vsub.s32 %v935, %v937
        %v939 = vrot.slane %v925, %v938
        %v940 = vcombine.low %v453, %v461
        %v941 = vcombine.high %v453, %v461
        %v943 = vunpack.c.l.s4 1983009808
        %v944 = vunpack.c.0.s8 %v943
        %v945 = vlaneseq
        %v946 = vshrl.u32 %v945, 7
        %v947 = vsub.s32 %v944, %v946
        %v948 = vrot.slane %v940, %v947
        %v950 = vunpack.c.l.s4 1983009808
        %v951 = vunpack.c.0.s8 %v950
        %v952 = vlaneseq
        %v953 = vshrl.u32 %v952, 7
        %v954 = vsub.s32 %v951, %v953
        %v955 = vrot.slane %v941, %v954
        %v956 = vcombine.low %v457, %v465
        %v957 = vcombine.high %v457, %v465
        %v959 = vunpack.c.l.s4 1983009808
        %v960 = vunpack.c.0.s8 %v959
        %v961 = vlaneseq
        %v962 = vshrl.u32 %v961, 7
        %v963 = vsub.s32 %v960, %v962
        %v964 = vrot.slane %v956, %v963
        %v966 = vunpack.c.l.s4 1983009808
        %v967 = vunpack.c.0.s8 %v966
        %v968 = vlaneseq
        %v969 = vshrl.u32 %v968, 7
        %v970 = vsub.s32 %v967, %v969
        %v971 = vrot.slane %v957, %v970
        %v972 = vcombine.low %v916, %v932
        %v973 = vcombine.high %v916, %v932
        %v975 = vunpack.c.l.s4 1934713408
        %v976 = vunpack.c.0.s8 %v975
        %v977 = vlaneseq
        %v978 = vshrl.u32 %v977, 7
        %v979 = vsub.s32 %v976, %v978
        %v980 = vrot.slane %v972, %v979
        %v982 = vunpack.c.l.s4 1934713408
        %v983 = vunpack.c.0.s8 %v982
        %v984 = vlaneseq
        %v985 = vshrl.u32 %v984, 7
        %v986 = vsub.s32 %v983, %v985
        %v987 = vrot.slane %v973, %v986
        %v988 = vcombine.low %v923, %v939
        %v989 = vcombine.high %v923, %v939
        %v991 = vunpack.c.l.s4 1934713408
        %v992 = vunpack.c.0.s8 %v991
        %v993 = vlaneseq
        %v994 = vshrl.u32 %v993, 7
        %v995 = vsub.s32 %v992, %v994
        %v996 = vrot.slane %v988, %v995
        %v998 = vunpack.c.l.s4 1934713408
        %v999 = vunpack.c.0.s8 %v998
        %v1000 = vlaneseq
        %v1001 = vshrl.u32 %v1000, 7
        %v1002 = vsub.s32 %v999, %v1001
        %v1003 = vrot.slane %v989, %v1002
        %v1004 = vcombine.low %v948, %v964
        %v1005 = vcombine.high %v948, %v964
        %v1007 = vunpack.c.l.s4 1934713408
        %v1008 = vunpack.c.0.s8 %v1007
        %v1009 = vlaneseq
        %v1010 = vshrl.u32 %v1009, 7
        %v1011 = vsub.s32 %v1008, %v1010
        %v1012 = vrot.slane %v1004, %v1011
        %v1014 = vunpack.c.l.s4 1934713408
        %v1015 = vunpack.c.0.s8 %v1014
        %v1016 = vlaneseq
        %v1017 = vshrl.u32 %v1016, 7
        %v1018 = vsub.s32 %v1015, %v1017
        %v1019 = vrot.slane %v1005, %v1018
        %v1020 = vcombine.low %v955, %v971
        %v1021 = vcombine.high %v955, %v971
        %v1023 = vunpack.c.l.s4 1934713408
        %v1024 = vunpack.c.0.s8 %v1023
        %v1025 = vlaneseq
        %v1026 = vshrl.u32 %v1025, 7
        %v1027 = vsub.s32 %v1024, %v1026
        %v1028 = vrot.slane %v1020, %v1027
        %v1030 = vunpack.c.l.s4 1934713408
        %v1031 = vunpack.c.0.s8 %v1030
        %v1032 = vlaneseq
        %v1033 = vshrl.u32 %v1032, 7
        %v1034 = vsub.s32 %v1031, %v1033
        %v1035 = vrot.slane %v1021, %v1034
        %v1036 = vcombine.low %v980, %v1012
        %v1037 = vcombine.high %v980, %v1012
        %v1038 = vcombine.low %v987, %v1019
        %v1039 = vcombine.high %v987, %v1019
        %v1040 = vcombine.low %v996, %v1028
        %v1041 = vcombine.high %v996, %v1028
        %v1042 = vcombine.low %v1003, %v1035
        %v1043 = vcombine.high %v1003, %v1035
        %v1044 = vcombine.low %v477, %v485
        %v1045 = vcombine.high %v477, %v485
        %v1047 = vunpack.c.l.s4 1983009808
        %v1048 = vunpack.c.0.s8 %v1047
        %v1049 = vlaneseq
        %v1050 = vshrl.u32 %v1049, 7
        %v1051 = vsub.s32 %v1048, %v1050
        %v1052 = vrot.slane %v1044, %v1051
        %v1054 = vunpack.c.l.s4 1983009808
        %v1055 = vunpack.c.0.s8 %v1054
        %v1056 = vlaneseq
        %v1057 = vshrl.u32 %v1056, 7
        %v1058 = vsub.s32 %v1055, %v1057
        %v1059 = vrot.slane %v1045, %v1058
        %v1060 = vcombine.low %v481, %v489
        %v1061 = vcombine.high %v481, %v489
        %v1063 = vunpack.c.l.s4 1983009808
        %v1064 = vunpack.c.0.s8 %v1063
        %v1065 = vlaneseq
        %v1066 = vshrl.u32 %v1065, 7
        %v1067 = vsub.s32 %v1064, %v1066
        %v1068 = vrot.slane %v1060, %v1067
        %v1070 = vunpack.c.l.s4 1983009808
        %v1071 = vunpack.c.0.s8 %v1070
        %v1072 = vlaneseq
        %v1073 = vshrl.u32 %v1072, 7
        %v1074 = vsub.s32 %v1071, %v1073
        %v1075 = vrot.slane %v1061, %v1074
        %v1076 = vcombine.low %v1052, %v1068
        %v1077 = vcombine.high %v1052, %v1068
        %v1079 = vunpack.c.l.s4 1934713408
        %v1080 = vunpack.c.0.s8 %v1079
        %v1081 = vlaneseq
        %v1082 = vshrl.u32 %v1081, 7
        %v1083 = vsub.s32 %v1080, %v1082
        %v1084 = vrot.slane %v1076, %v1083
        %v1086 = vunpack.c.l.s4 1934713408
        %v1087 = vunpack.c.0.s8 %v1086
        %v1088 = vlaneseq
        %v1089 = vshrl.u32 %v1088, 7
        %v1090 = vsub.s32 %v1087, %v1089
        %v1091 = vrot.slane %v1077, %v1090
        %v1092 = vcombine.low %v1059, %v1075
        %v1093 = vcombine.high %v1059, %v1075
        %v1095 = vunpack.c.l.s4 1934713408
        %v1096 = vunpack.c.0.s8 %v1095
        %v1097 = vlaneseq
        %v1098 = vshrl.u32 %v1097, 7
        %v1099 = vsub.s32 %v1096, %v1098
        %v1100 = vrot.slane %v1092, %v1099
        %v1102 = vunpack.c.l.s4 1934713408
        %v1103 = vunpack.c.0.s8 %v1102
        %v1104 = vlaneseq
        %v1105 = vshrl.u32 %v1104, 7
        %v1106 = vsub.s32 %v1103, %v1105
        %v1107 = vrot.slane %v1093, %v1106
        %v1108 = vcombine.high %v1084, 0.0
        %v1109 = vcombine.high %v1091, 0.0
        %v1110 = vcombine.high %v1100, 0.0
        %v1111 = vcombine.high %v1107, 0.0
        %v1112 = vcombine.low %v275, %v281
        %v1113 = vcombine.high %v275, %v281
        %v1115 = vunpack.c.l.s4 1983009808
        %v1116 = vunpack.c.0.s8 %v1115
        %v1117 = vlaneseq
        %v1118 = vshrl.u32 %v1117, 7
        %v1119 = vsub.s32 %v1116, %v1118
        %v1120 = vrot.slane %v1112, %v1119
        %v1122 = vunpack.c.l.s4 1983009808
        %v1123 = vunpack.c.0.s8 %v1122
        %v1124 = vlaneseq
        %v1125 = vshrl.u32 %v1124, 7
        %v1126 = vsub.s32 %v1123, %v1125
        %v1127 = vrot.slane %v1113, %v1126
        %v1128 = vcombine.low %v278, %v284
        %v1129 = vcombine.high %v278, %v284
        %v1131 = vunpack.c.l.s4 1983009808
        %v1132 = vunpack.c.0.s8 %v1131
        %v1133 = vlaneseq
        %v1134 = vshrl.u32 %v1133, 7
        %v1135 = vsub.s32 %v1132, %v1134
        %v1136 = vrot.slane %v1128, %v1135
        %v1138 = vunpack.c.l.s4 1983009808
        %v1139 = vunpack.c.0.s8 %v1138
        %v1140 = vlaneseq
        %v1141 = vshrl.u32 %v1140, 7
        %v1142 = vsub.s32 %v1139, %v1141
        %v1143 = vrot.slane %v1129, %v1142
        %v1144 = vcombine.low %v297, %v305
        %v1145 = vcombine.high %v297, %v305
        %v1147 = vunpack.c.l.s4 1983009808
        %v1148 = vunpack.c.0.s8 %v1147
        %v1149 = vlaneseq
        %v1150 = vshrl.u32 %v1149, 7
        %v1151 = vsub.s32 %v1148, %v1150
        %v1152 = vrot.slane %v1144, %v1151
        %v1154 = vunpack.c.l.s4 1983009808
        %v1155 = vunpack.c.0.s8 %v1154
        %v1156 = vlaneseq
        %v1157 = vshrl.u32 %v1156, 7
        %v1158 = vsub.s32 %v1155, %v1157
        %v1159 = vrot.slane %v1145, %v1158
        %v1160 = vcombine.low %v301, %v309
        %v1161 = vcombine.high %v301, %v309
        %v1163 = vunpack.c.l.s4 1983009808
        %v1164 = vunpack.c.0.s8 %v1163
        %v1165 = vlaneseq
        %v1166 = vshrl.u32 %v1165, 7
        %v1167 = vsub.s32 %v1164, %v1166
        %v1168 = vrot.slane %v1160, %v1167
        %v1170 = vunpack.c.l.s4 1983009808
        %v1171 = vunpack.c.0.s8 %v1170
        %v1172 = vlaneseq
        %v1173 = vshrl.u32 %v1172, 7
        %v1174 = vsub.s32 %v1171, %v1173
        %v1175 = vrot.slane %v1161, %v1174
        %v1176 = vcombine.low %v1120, %v1136
        %v1177 = vcombine.high %v1120, %v1136
        %v1179 = vunpack.c.l.s4 1934713408
        %v1180 = vunpack.c.0.s8 %v1179
        %v1181 = vlaneseq
        %v1182 = vshrl.u32 %v1181, 7
        %v1183 = vsub.s32 %v1180, %v1182
        %v1184 = vrot.slane %v1176, %v1183
        %v1186 = vunpack.c.l.s4 1934713408
        %v1187 = vunpack.c.0.s8 %v1186
        %v1188 = vlaneseq
        %v1189 = vshrl.u32 %v1188, 7
        %v1190 = vsub.s32 %v1187, %v1189
        %v1191 = vrot.slane %v1177, %v1190
        %v1192 = vcombine.low %v1127, %v1143
        %v1193 = vcombine.high %v1127, %v1143
        %v1195 = vunpack.c.l.s4 1934713408
        %v1196 = vunpack.c.0.s8 %v1195
        %v1197 = vlaneseq
        %v1198 = vshrl.u32 %v1197, 7
        %v1199 = vsub.s32 %v1196, %v1198
        %v1200 = vrot.slane %v1192, %v1199
        %v1202 = vunpack.c.l.s4 1934713408
        %v1203 = vunpack.c.0.s8 %v1202
        %v1204 = vlaneseq
        %v1205 = vshrl.u32 %v1204, 7
        %v1206 = vsub.s32 %v1203, %v1205
        %v1207 = vrot.slane %v1193, %v1206
        %v1208 = vcombine.low %v1152, %v1168
        %v1209 = vcombine.high %v1152, %v1168
        %v1211 = vunpack.c.l.s4 1934713408
        %v1212 = vunpack.c.0.s8 %v1211
        %v1213 = vlaneseq
        %v1214 = vshrl.u32 %v1213, 7
        %v1215 = vsub.s32 %v1212, %v1214
        %v1216 = vrot.slane %v1208, %v1215
        %v1218 = vunpack.c.l.s4 1934713408
        %v1219 = vunpack.c.0.s8 %v1218
        %v1220 = vlaneseq
        %v1221 = vshrl.u32 %v1220, 7
        %v1222 = vsub.s32 %v1219, %v1221
        %v1223 = vrot.slane %v1209, %v1222
        %v1224 = vcombine.low %v1159, %v1175
        %v1225 = vcombine.high %v1159, %v1175
        %v1227 = vunpack.c.l.s4 1934713408
        %v1228 = vunpack.c.0.s8 %v1227
        %v1229 = vlaneseq
        %v1230 = vshrl.u32 %v1229, 7
        %v1231 = vsub.s32 %v1228, %v1230
        %v1232 = vrot.slane %v1224, %v1231
        %v1234 = vunpack.c.l.s4 1934713408
        %v1235 = vunpack.c.0.s8 %v1234
        %v1236 = vlaneseq
        %v1237 = vshrl.u32 %v1236, 7
        %v1238 = vsub.s32 %v1235, %v1237
        %v1239 = vrot.slane %v1225, %v1238
        %v1240 = vcombine.low %v1184, %v1216
        %v1241 = vcombine.high %v1184, %v1216
        %v1242 = vcombine.low %v1191, %v1223
        %v1243 = vcombine.high %v1191, %v1223
        %v1244 = vcombine.low %v1200, %v1232
        %v1245 = vcombine.high %v1200, %v1232
        %v1246 = vcombine.low %v1207, %v1239
        %v1247 = vcombine.high %v1207, %v1239
        %v1248 = vcombine.low %v321, %v329
        %v1249 = vcombine.high %v321, %v329
        %v1251 = vunpack.c.l.s4 1983009808
        %v1252 = vunpack.c.0.s8 %v1251
        %v1253 = vlaneseq
        %v1254 = vshrl.u32 %v1253, 7
        %v1255 = vsub.s32 %v1252, %v1254
        %v1256 = vrot.slane %v1248, %v1255
        %v1258 = vunpack.c.l.s4 1983009808
        %v1259 = vunpack.c.0.s8 %v1258
        %v1260 = vlaneseq
        %v1261 = vshrl.u32 %v1260, 7
        %v1262 = vsub.s32 %v1259, %v1261
        %v1263 = vrot.slane %v1249, %v1262
        %v1264 = vcombine.low %v325, %v333
        %v1265 = vcombine.high %v325, %v333
        %v1267 = vunpack.c.l.s4 1983009808
        %v1268 = vunpack.c.0.s8 %v1267
        %v1269 = vlaneseq
        %v1270 = vshrl.u32 %v1269, 7
        %v1271 = vsub.s32 %v1268, %v1270
        %v1272 = vrot.slane %v1264, %v1271
        %v1274 = vunpack.c.l.s4 1983009808
        %v1275 = vunpack.c.0.s8 %v1274
        %v1276 = vlaneseq
        %v1277 = vshrl.u32 %v1276, 7
        %v1278 = vsub.s32 %v1275, %v1277
        %v1279 = vrot.slane %v1265, %v1278
        %v1280 = vcombine.low %v351, %v361
        %v1281 = vcombine.high %v351, %v361
        %v1283 = vunpack.c.l.s4 1983009808
        %v1284 = vunpack.c.0.s8 %v1283
        %v1285 = vlaneseq
        %v1286 = vshrl.u32 %v1285, 7
        %v1287 = vsub.s32 %v1284, %v1286
        %v1288 = vrot.slane %v1280, %v1287
        %v1290 = vunpack.c.l.s4 1983009808
        %v1291 = vunpack.c.0.s8 %v1290
        %v1292 = vlaneseq
        %v1293 = vshrl.u32 %v1292, 7
        %v1294 = vsub.s32 %v1291, %v1293
        %v1295 = vrot.slane %v1281, %v1294
        %v1296 = vcombine.low %v356, %v366
        %v1297 = vcombine.high %v356, %v366
        %v1299 = vunpack.c.l.s4 1983009808
        %v1300 = vunpack.c.0.s8 %v1299
        %v1301 = vlaneseq
        %v1302 = vshrl.u32 %v1301, 7
        %v1303 = vsub.s32 %v1300, %v1302
        %v1304 = vrot.slane %v1296, %v1303
        %v1306 = vunpack.c.l.s4 1983009808
        %v1307 = vunpack.c.0.s8 %v1306
        %v1308 = vlaneseq
        %v1309 = vshrl.u32 %v1308, 7
        %v1310 = vsub.s32 %v1307, %v1309
        %v1311 = vrot.slane %v1297, %v1310
        %v1312 = vcombine.low %v1256, %v1272
        %v1313 = vcombine.high %v1256, %v1272
        %v1315 = vunpack.c.l.s4 1934713408
        %v1316 = vunpack.c.0.s8 %v1315
        %v1317 = vlaneseq
        %v1318 = vshrl.u32 %v1317, 7
        %v1319 = vsub.s32 %v1316, %v1318
        %v1320 = vrot.slane %v1312, %v1319
        %v1322 = vunpack.c.l.s4 1934713408
        %v1323 = vunpack.c.0.s8 %v1322
        %v1324 = vlaneseq
        %v1325 = vshrl.u32 %v1324, 7
        %v1326 = vsub.s32 %v1323, %v1325
        %v1327 = vrot.slane %v1313, %v1326
        %v1328 = vcombine.low %v1263, %v1279
        %v1329 = vcombine.high %v1263, %v1279
        %v1331 = vunpack.c.l.s4 1934713408
        %v1332 = vunpack.c.0.s8 %v1331
        %v1333 = vlaneseq
        %v1334 = vshrl.u32 %v1333, 7
        %v1335 = vsub.s32 %v1332, %v1334
        %v1336 = vrot.slane %v1328, %v1335
        %v1338 = vunpack.c.l.s4 1934713408
        %v1339 = vunpack.c.0.s8 %v1338
        %v1340 = vlaneseq
        %v1341 = vshrl.u32 %v1340, 7
        %v1342 = vsub.s32 %v1339, %v1341
        %v1343 = vrot.slane %v1329, %v1342
        %v1344 = vcombine.low %v1288, %v1304
        %v1345 = vcombine.high %v1288, %v1304
        %v1347 = vunpack.c.l.s4 1934713408
        %v1348 = vunpack.c.0.s8 %v1347
        %v1349 = vlaneseq
        %v1350 = vshrl.u32 %v1349, 7
        %v1351 = vsub.s32 %v1348, %v1350
        %v1352 = vrot.slane %v1344, %v1351
        %v1354 = vunpack.c.l.s4 1934713408
        %v1355 = vunpack.c.0.s8 %v1354
        %v1356 = vlaneseq
        %v1357 = vshrl.u32 %v1356, 7
        %v1358 = vsub.s32 %v1355, %v1357
        %v1359 = vrot.slane %v1345, %v1358
        %v1360 = vcombine.low %v1295, %v1311
        %v1361 = vcombine.high %v1295, %v1311
        %v1363 = vunpack.c.l.s4 1934713408
        %v1364 = vunpack.c.0.s8 %v1363
        %v1365 = vlaneseq
        %v1366 = vshrl.u32 %v1365, 7
        %v1367 = vsub.s32 %v1364, %v1366
        %v1368 = vrot.slane %v1360, %v1367
        %v1370 = vunpack.c.l.s4 1934713408
        %v1371 = vunpack.c.0.s8 %v1370
        %v1372 = vlaneseq
        %v1373 = vshrl.u32 %v1372, 7
        %v1374 = vsub.s32 %v1371, %v1373
        %v1375 = vrot.slane %v1361, %v1374
        %v1376 = vcombine.low %v1320, %v1352
        %v1377 = vcombine.high %v1320, %v1352
        %v1378 = vcombine.low %v1327, %v1359
        %v1379 = vcombine.high %v1327, %v1359
        %v1380 = vcombine.low %v1336, %v1368
        %v1381 = vcombine.high %v1336, %v1368
        %v1382 = vcombine.low %v1343, %v1375
        %v1383 = vcombine.high %v1343, %v1375
        %v1384 = vcombine.low %v378, %v386
        %v1385 = vcombine.high %v378, %v386
        %v1387 = vunpack.c.l.s4 1983009808
        %v1388 = vunpack.c.0.s8 %v1387
        %v1389 = vlaneseq
        %v1390 = vshrl.u32 %v1389, 7
        %v1391 = vsub.s32 %v1388, %v1390
        %v1392 = vrot.slane %v1384, %v1391
        %v1394 = vunpack.c.l.s4 1983009808
        %v1395 = vunpack.c.0.s8 %v1394
        %v1396 = vlaneseq
        %v1397 = vshrl.u32 %v1396, 7
        %v1398 = vsub.s32 %v1395, %v1397
        %v1399 = vrot.slane %v1385, %v1398
        %v1400 = vcombine.low %v382, %v390
        %v1401 = vcombine.high %v382, %v390
        %v1403 = vunpack.c.l.s4 1983009808
        %v1404 = vunpack.c.0.s8 %v1403
        %v1405 = vlaneseq
        %v1406 = vshrl.u32 %v1405, 7
        %v1407 = vsub.s32 %v1404, %v1406
        %v1408 = vrot.slane %v1400, %v1407
        %v1410 = vunpack.c.l.s4 1983009808
        %v1411 = vunpack.c.0.s8 %v1410
        %v1412 = vlaneseq
        %v1413 = vshrl.u32 %v1412, 7
        %v1414 = vsub.s32 %v1411, %v1413
        %v1415 = vrot.slane %v1401, %v1414
        %v1416 = vcombine.low %v402, %v410
        %v1417 = vcombine.high %v402, %v410
        %v1419 = vunpack.c.l.s4 1983009808
        %v1420 = vunpack.c.0.s8 %v1419
        %v1421 = vlaneseq
        %v1422 = vshrl.u32 %v1421, 7
        %v1423 = vsub.s32 %v1420, %v1422
        %v1424 = vrot.slane %v1416, %v1423
        %v1426 = vunpack.c.l.s4 1983009808
        %v1427 = vunpack.c.0.s8 %v1426
        %v1428 = vlaneseq
        %v1429 = vshrl.u32 %v1428, 7
        %v1430 = vsub.s32 %v1427, %v1429
        %v1431 = vrot.slane %v1417, %v1430
        %v1432 = vcombine.low %v406, %v414
        %v1433 = vcombine.high %v406, %v414
        %v1435 = vunpack.c.l.s4 1983009808
        %v1436 = vunpack.c.0.s8 %v1435
        %v1437 = vlaneseq
        %v1438 = vshrl.u32 %v1437, 7
        %v1439 = vsub.s32 %v1436, %v1438
        %v1440 = vrot.slane %v1432, %v1439
        %v1442 = vunpack.c.l.s4 1983009808
        %v1443 = vunpack.c.0.s8 %v1442
        %v1444 = vlaneseq
        %v1445 = vshrl.u32 %v1444, 7
        %v1446 = vsub.s32 %v1443, %v1445
        %v1447 = vrot.slane %v1433, %v1446
        %v1448 = vcombine.low %v1392, %v1408
        %v1449 = vcombine.high %v1392, %v1408
        %v1451 = vunpack.c.l.s4 1934713408
        %v1452 = vunpack.c.0.s8 %v1451
        %v1453 = vlaneseq
        %v1454 = vshrl.u32 %v1453, 7
        %v1455 = vsub.s32 %v1452, %v1454
        %v1456 = vrot.slane %v1448, %v1455
        %v1458 = vunpack.c.l.s4 1934713408
        %v1459 = vunpack.c.0.s8 %v1458
        %v1460 = vlaneseq
        %v1461 = vshrl.u32 %v1460, 7
        %v1462 = vsub.s32 %v1459, %v1461
        %v1463 = vrot.slane %v1449, %v1462
        %v1464 = vcombine.low %v1399, %v1415
        %v1465 = vcombine.high %v1399, %v1415
        %v1467 = vunpack.c.l.s4 1934713408
        %v1468 = vunpack.c.0.s8 %v1467
        %v1469 = vlaneseq
        %v1470 = vshrl.u32 %v1469, 7
        %v1471 = vsub.s32 %v1468, %v1470
        %v1472 = vrot.slane %v1464, %v1471
        %v1474 = vunpack.c.l.s4 1934713408
        %v1475 = vunpack.c.0.s8 %v1474
        %v1476 = vlaneseq
        %v1477 = vshrl.u32 %v1476, 7
        %v1478 = vsub.s32 %v1475, %v1477
        %v1479 = vrot.slane %v1465, %v1478
        %v1480 = vcombine.low %v1424, %v1440
        %v1481 = vcombine.high %v1424, %v1440
        %v1483 = vunpack.c.l.s4 1934713408
        %v1484 = vunpack.c.0.s8 %v1483
        %v1485 = vlaneseq
        %v1486 = vshrl.u32 %v1485, 7
        %v1487 = vsub.s32 %v1484, %v1486
        %v1488 = vrot.slane %v1480, %v1487
        %v1490 = vunpack.c.l.s4 1934713408
        %v1491 = vunpack.c.0.s8 %v1490
        %v1492 = vlaneseq
        %v1493 = vshrl.u32 %v1492, 7
        %v1494 = vsub.s32 %v1491, %v1493
        %v1495 = vrot.slane %v1481, %v1494
        %v1496 = vcombine.low %v1431, %v1447
        %v1497 = vcombine.high %v1431, %v1447
        %v1499 = vunpack.c.l.s4 1934713408
        %v1500 = vunpack.c.0.s8 %v1499
        %v1501 = vlaneseq
        %v1502 = vshrl.u32 %v1501, 7
        %v1503 = vsub.s32 %v1500, %v1502
        %v1504 = vrot.slane %v1496, %v1503
        %v1506 = vunpack.c.l.s4 1934713408
        %v1507 = vunpack.c.0.s8 %v1506
        %v1508 = vlaneseq
        %v1509 = vshrl.u32 %v1508, 7
        %v1510 = vsub.s32 %v1507, %v1509
        %v1511 = vrot.slane %v1497, %v1510
        %v1512 = vcombine.low %v1456, %v1488
        %v1513 = vcombine.high %v1456, %v1488
        %v1514 = vcombine.low %v1463, %v1495
        %v1515 = vcombine.high %v1463, %v1495
        %v1516 = vcombine.low %v1472, %v1504
        %v1517 = vcombine.high %v1472, %v1504
        %v1518 = vcombine.low %v1479, %v1511
        %v1519 = vcombine.high %v1479, %v1511
        %v1520 = vcombine.low %v428, %v438
        %v1521 = vcombine.high %v428, %v438
        %v1523 = vunpack.c.l.s4 1983009808
        %v1524 = vunpack.c.0.s8 %v1523
        %v1525 = vlaneseq
        %v1526 = vshrl.u32 %v1525, 7
        %v1527 = vsub.s32 %v1524, %v1526
        %v1528 = vrot.slane %v1520, %v1527
        %v1530 = vunpack.c.l.s4 1983009808
        %v1531 = vunpack.c.0.s8 %v1530
        %v1532 = vlaneseq
        %v1533 = vshrl.u32 %v1532, 7
        %v1534 = vsub.s32 %v1531, %v1533
        %v1535 = vrot.slane %v1521, %v1534
        %v1536 = vcombine.low %v433, %v443
        %v1537 = vcombine.high %v433, %v443
        %v1539 = vunpack.c.l.s4 1983009808
        %v1540 = vunpack.c.0.s8 %v1539
        %v1541 = vlaneseq
        %v1542 = vshrl.u32 %v1541, 7
        %v1543 = vsub.s32 %v1540, %v1542
        %v1544 = vrot.slane %v1536, %v1543
        %v1546 = vunpack.c.l.s4 1983009808
        %v1547 = vunpack.c.0.s8 %v1546
        %v1548 = vlaneseq
        %v1549 = vshrl.u32 %v1548, 7
        %v1550 = vsub.s32 %v1547, %v1549
        %v1551 = vrot.slane %v1537, %v1550
        %v1552 = vcombine.low %v455, %v463
        %v1553 = vcombine.high %v455, %v463
        %v1555 = vunpack.c.l.s4 1983009808
        %v1556 = vunpack.c.0.s8 %v1555
        %v1557 = vlaneseq
        %v1558 = vshrl.u32 %v1557, 7
        %v1559 = vsub.s32 %v1556, %v1558
        %v1560 = vrot.slane %v1552, %v1559
        %v1562 = vunpack.c.l.s4 1983009808
        %v1563 = vunpack.c.0.s8 %v1562
        %v1564 = vlaneseq
        %v1565 = vshrl.u32 %v1564, 7
        %v1566 = vsub.s32 %v1563, %v1565
        %v1567 = vrot.slane %v1553, %v1566
        %v1568 = vcombine.low %v459, %v467
        %v1569 = vcombine.high %v459, %v467
        %v1571 = vunpack.c.l.s4 1983009808
        %v1572 = vunpack.c.0.s8 %v1571
        %v1573 = vlaneseq
        %v1574 = vshrl.u32 %v1573, 7
        %v1575 = vsub.s32 %v1572, %v1574
        %v1576 = vrot.slane %v1568, %v1575
        %v1578 = vunpack.c.l.s4 1983009808
        %v1579 = vunpack.c.0.s8 %v1578
        %v1580 = vlaneseq
        %v1581 = vshrl.u32 %v1580, 7
        %v1582 = vsub.s32 %v1579, %v1581
        %v1583 = vrot.slane %v1569, %v1582
        %v1584 = vcombine.low %v1528, %v1544
        %v1585 = vcombine.high %v1528, %v1544
        %v1587 = vunpack.c.l.s4 1934713408
        %v1588 = vunpack.c.0.s8 %v1587
        %v1589 = vlaneseq
        %v1590 = vshrl.u32 %v1589, 7
        %v1591 = vsub.s32 %v1588, %v1590
        %v1592 = vrot.slane %v1584, %v1591
        %v1594 = vunpack.c.l.s4 1934713408
        %v1595 = vunpack.c.0.s8 %v1594
        %v1596 = vlaneseq
        %v1597 = vshrl.u32 %v1596, 7
        %v1598 = vsub.s32 %v1595, %v1597
        %v1599 = vrot.slane %v1585, %v1598
        %v1600 = vcombine.low %v1535, %v1551
        %v1601 = vcombine.high %v1535, %v1551
        %v1603 = vunpack.c.l.s4 1934713408
        %v1604 = vunpack.c.0.s8 %v1603
        %v1605 = vlaneseq
        %v1606 = vshrl.u32 %v1605, 7
        %v1607 = vsub.s32 %v1604, %v1606
        %v1608 = vrot.slane %v1600, %v1607
        %v1610 = vunpack.c.l.s4 1934713408
        %v1611 = vunpack.c.0.s8 %v1610
        %v1612 = vlaneseq
        %v1613 = vshrl.u32 %v1612, 7
        %v1614 = vsub.s32 %v1611, %v1613
        %v1615 = vrot.slane %v1601, %v1614
        %v1616 = vcombine.low %v1560, %v1576
        %v1617 = vcombine.high %v1560, %v1576
        %v1619 = vunpack.c.l.s4 1934713408
        %v1620 = vunpack.c.0.s8 %v1619
        %v1621 = vlaneseq
        %v1622 = vshrl.u32 %v1621, 7
        %v1623 = vsub.s32 %v1620, %v1622
        %v1624 = vrot.slane %v1616, %v1623
        %v1626 = vunpack.c.l.s4 1934713408
        %v1627 = vunpack.c.0.s8 %v1626
        %v1628 = vlaneseq
        %v1629 = vshrl.u32 %v1628, 7
        %v1630 = vsub.s32 %v1627, %v1629
        %v1631 = vrot.slane %v1617, %v1630
        %v1632 = vcombine.low %v1567, %v1583
        %v1633 = vcombine.high %v1567, %v1583
        %v1635 = vunpack.c.l.s4 1934713408
        %v1636 = vunpack.c.0.s8 %v1635
        %v1637 = vlaneseq
        %v1638 = vshrl.u32 %v1637, 7
        %v1639 = vsub.s32 %v1636, %v1638
        %v1640 = vrot.slane %v1632, %v1639
        %v1642 = vunpack.c.l.s4 1934713408
        %v1643 = vunpack.c.0.s8 %v1642
        %v1644 = vlaneseq
        %v1645 = vshrl.u32 %v1644, 7
        %v1646 = vsub.s32 %v1643, %v1645
        %v1647 = vrot.slane %v1633, %v1646
        %v1648 = vcombine.low %v1592, %v1624
        %v1649 = vcombine.high %v1592, %v1624
        %v1650 = vcombine.low %v1599, %v1631
        %v1651 = vcombine.high %v1599, %v1631
        %v1652 = vcombine.low %v1608, %v1640
        %v1653 = vcombine.high %v1608, %v1640
        %v1654 = vcombine.low %v1615, %v1647
        %v1655 = vcombine.high %v1615, %v1647
        %v1656 = vcombine.low %v479, %v487
        %v1657 = vcombine.high %v479, %v487
        %v1659 = vunpack.c.l.s4 1983009808
        %v1660 = vunpack.c.0.s8 %v1659
        %v1661 = vlaneseq
        %v1662 = vshrl.u32 %v1661, 7
        %v1663 = vsub.s32 %v1660, %v1662
        %v1664 = vrot.slane %v1656, %v1663
        %v1666 = vunpack.c.l.s4 1983009808
        %v1667 = vunpack.c.0.s8 %v1666
        %v1668 = vlaneseq
        %v1669 = vshrl.u32 %v1668, 7
        %v1670 = vsub.s32 %v1667, %v1669
        %v1671 = vrot.slane %v1657, %v1670
        %v1672 = vcombine.low %v483, %v491
        %v1673 = vcombine.high %v483, %v491
        %v1675 = vunpack.c.l.s4 1983009808
        %v1676 = vunpack.c.0.s8 %v1675
        %v1677 = vlaneseq
        %v1678 = vshrl.u32 %v1677, 7
        %v1679 = vsub.s32 %v1676, %v1678
        %v1680 = vrot.slane %v1672, %v1679
        %v1682 = vunpack.c.l.s4 1983009808
        %v1683 = vunpack.c.0.s8 %v1682
        %v1684 = vlaneseq
        %v1685 = vshrl.u32 %v1684, 7
        %v1686 = vsub.s32 %v1683, %v1685
        %v1687 = vrot.slane %v1673, %v1686
        %v1688 = vcombine.low %v1664, %v1680
        %v1689 = vcombine.high %v1664, %v1680
        %v1691 = vunpack.c.l.s4 1934713408
        %v1692 = vunpack.c.0.s8 %v1691
        %v1693 = vlaneseq
        %v1694 = vshrl.u32 %v1693, 7
        %v1695 = vsub.s32 %v1692, %v1694
        %v1696 = vrot.slane %v1688, %v1695
        %v1698 = vunpack.c.l.s4 1934713408
        %v1699 = vunpack.c.0.s8 %v1698
        %v1700 = vlaneseq
        %v1701 = vshrl.u32 %v1700, 7
        %v1702 = vsub.s32 %v1699, %v1701
        %v1703 = vrot.slane %v1689, %v1702
        %v1704 = vcombine.low %v1671, %v1687
        %v1705 = vcombine.high %v1671, %v1687
        %v1707 = vunpack.c.l.s4 1934713408
        %v1708 = vunpack.c.0.s8 %v1707
        %v1709 = vlaneseq
        %v1710 = vshrl.u32 %v1709, 7
        %v1711 = vsub.s32 %v1708, %v1710
        %v1712 = vrot.slane %v1704, %v1711
        %v1714 = vunpack.c.l.s4 1934713408
        %v1715 = vunpack.c.0.s8 %v1714
        %v1716 = vlaneseq
        %v1717 = vshrl.u32 %v1716, 7
        %v1718 = vsub.s32 %v1715, %v1717
        %v1719 = vrot.slane %v1705, %v1718
        %v1720 = vcombine.high %v1696, 0.0
        %v1721 = vcombine.high %v1703, 0.0
        %v1722 = vcombine.high %v1712, 0.0
        %v1723 = vcombine.high %v1719, 0.0
        %1729 = vrot.lane.b32.xlu0 %v629, 16
        %v1730 = vpop.permute.xlu0 %1729
        %1731 = vrot.lane.b32.xlu0 %v765, 16
        %v1732 = vpop.permute.xlu0 %1731
        %1733 = vrot.lane.b32.xlu0 %v901, 16
        %v1734 = vpop.permute.xlu0 %1733
        %1735 = vrot.lane.b32.xlu0 %v1037, 16
        %v1736 = vpop.permute.xlu0 %1735
        %1737 = vrot.lane.b32.xlu0 %v1108, 16
        %v1738 = vpop.permute.xlu0 %1737
        %1749 = vrot.lane.b32.xlu0 %v630, 32
        %v1750 = vpop.permute.xlu0 %1749
        %1751 = vrot.lane.b32.xlu0 %v766, 32
        %v1752 = vpop.permute.xlu0 %1751
        %1753 = vrot.lane.b32.xlu0 %v902, 32
        %v1754 = vpop.permute.xlu0 %1753
        %1755 = vrot.lane.b32.xlu0 %v1038, 32
        %v1756 = vpop.permute.xlu0 %1755
        %1757 = vrot.lane.b32.xlu0 %v1091, 32
        %v1758 = vpop.permute.xlu0 %1757
        %1769 = vrot.lane.b32.xlu0 %v631, 48
        %v1770 = vpop.permute.xlu0 %1769
        %1771 = vrot.lane.b32.xlu0 %v767, 48
        %v1772 = vpop.permute.xlu0 %1771
        %1773 = vrot.lane.b32.xlu0 %v903, 48
        %v1774 = vpop.permute.xlu0 %1773
        %1775 = vrot.lane.b32.xlu0 %v1039, 48
        %v1776 = vpop.permute.xlu0 %1775
        %1777 = vrot.lane.b32.xlu0 %v1109, 48
        %v1778 = vpop.permute.xlu0 %1777
        %1789 = vrot.lane.b32.xlu0 %v632, 64
        %v1790 = vpop.permute.xlu0 %1789
        %1791 = vrot.lane.b32.xlu0 %v768, 64
        %v1792 = vpop.permute.xlu0 %1791
        %1793 = vrot.lane.b32.xlu0 %v904, 64
        %v1794 = vpop.permute.xlu0 %1793
        %1795 = vrot.lane.b32.xlu0 %v1040, 64
        %v1796 = vpop.permute.xlu0 %1795
        %1797 = vrot.lane.b32.xlu0 %v1100, 64
        %v1798 = vpop.permute.xlu0 %1797
        %1809 = vrot.lane.b32.xlu0 %v633, 80
        %v1810 = vpop.permute.xlu0 %1809
        %1811 = vrot.lane.b32.xlu0 %v769, 80
        %v1812 = vpop.permute.xlu0 %1811
        %1813 = vrot.lane.b32.xlu0 %v905, 80
        %v1814 = vpop.permute.xlu0 %1813
        %1815 = vrot.lane.b32.xlu0 %v1041, 80
        %v1816 = vpop.permute.xlu0 %1815
        %1817 = vrot.lane.b32.xlu0 %v1110, 80
        %v1818 = vpop.permute.xlu0 %1817
        %1829 = vrot.lane.b32.xlu0 %v634, 96
        %v1830 = vpop.permute.xlu0 %1829
        %1831 = vrot.lane.b32.xlu0 %v770, 96
        %v1832 = vpop.permute.xlu0 %1831
        %1833 = vrot.lane.b32.xlu0 %v906, 96
        %v1834 = vpop.permute.xlu0 %1833
        %1835 = vrot.lane.b32.xlu0 %v1042, 96
        %v1836 = vpop.permute.xlu0 %1835
        %1837 = vrot.lane.b32.xlu0 %v1107, 96
        %v1838 = vpop.permute.xlu0 %1837
        %1849 = vrot.lane.b32.xlu0 %v635, 112
        %v1850 = vpop.permute.xlu0 %1849
        %1851 = vrot.lane.b32.xlu0 %v771, 112
        %v1852 = vpop.permute.xlu0 %1851
        %1853 = vrot.lane.b32.xlu0 %v907, 112
        %v1854 = vpop.permute.xlu0 %1853
        %1855 = vrot.lane.b32.xlu0 %v1043, 112
        %v1856 = vpop.permute.xlu0 %1855
        %1857 = vrot.lane.b32.xlu0 %v1111, 112
        %v1858 = vpop.permute.xlu0 %1857
        %1869 = vrot.lane.b32.xlu0 %v1241, 16
        %v1870 = vpop.permute.xlu0 %1869
        %1871 = vrot.lane.b32.xlu0 %v1377, 16
        %v1872 = vpop.permute.xlu0 %1871
        %1873 = vrot.lane.b32.xlu0 %v1513, 16
        %v1874 = vpop.permute.xlu0 %1873
        %1875 = vrot.lane.b32.xlu0 %v1649, 16
        %v1876 = vpop.permute.xlu0 %1875
        %1877 = vrot.lane.b32.xlu0 %v1720, 16
        %v1878 = vpop.permute.xlu0 %1877
        %1889 = vrot.lane.b32.xlu0 %v1242, 32
        %v1890 = vpop.permute.xlu0 %1889
        %1891 = vrot.lane.b32.xlu0 %v1378, 32
        %v1892 = vpop.permute.xlu0 %1891
        %1893 = vrot.lane.b32.xlu0 %v1514, 32
        %v1894 = vpop.permute.xlu0 %1893
        %1895 = vrot.lane.b32.xlu0 %v1650, 32
        %v1896 = vpop.permute.xlu0 %1895
        %1897 = vrot.lane.b32.xlu0 %v1703, 32
        %v1898 = vpop.permute.xlu0 %1897
        %1909 = vrot.lane.b32.xlu0 %v1243, 48
        %v1910 = vpop.permute.xlu0 %1909
        %1911 = vrot.lane.b32.xlu0 %v1379, 48
        %v1912 = vpop.permute.xlu0 %1911
        %1913 = vrot.lane.b32.xlu0 %v1515, 48
        %v1914 = vpop.permute.xlu0 %1913
        %1915 = vrot.lane.b32.xlu0 %v1651, 48
        %v1916 = vpop.permute.xlu0 %1915
        %1917 = vrot.lane.b32.xlu0 %v1721, 48
        %v1918 = vpop.permute.xlu0 %1917
        %1929 = vrot.lane.b32.xlu0 %v1244, 64
        %v1930 = vpop.permute.xlu0 %1929
        %1931 = vrot.lane.b32.xlu0 %v1380, 64
        %v1932 = vpop.permute.xlu0 %1931
        %1933 = vrot.lane.b32.xlu0 %v1516, 64
        %v1934 = vpop.permute.xlu0 %1933
        %1935 = vrot.lane.b32.xlu0 %v1652, 64
        %v1936 = vpop.permute.xlu0 %1935
        %1937 = vrot.lane.b32.xlu0 %v1712, 64
        %v1938 = vpop.permute.xlu0 %1937
        %1949 = vrot.lane.b32.xlu0 %v1245, 80
        %v1950 = vpop.permute.xlu0 %1949
        %1951 = vrot.lane.b32.xlu0 %v1381, 80
        %v1952 = vpop.permute.xlu0 %1951
        %1953 = vrot.lane.b32.xlu0 %v1517, 80
        %v1954 = vpop.permute.xlu0 %1953
        %1955 = vrot.lane.b32.xlu0 %v1653, 80
        %v1956 = vpop.permute.xlu0 %1955
        %1957 = vrot.lane.b32.xlu0 %v1722, 80
        %v1958 = vpop.permute.xlu0 %1957
        %1969 = vrot.lane.b32.xlu0 %v1246, 96
        %v1970 = vpop.permute.xlu0 %1969
        %1971 = vrot.lane.b32.xlu0 %v1382, 96
        %v1972 = vpop.permute.xlu0 %1971
        %1973 = vrot.lane.b32.xlu0 %v1518, 96
        %v1974 = vpop.permute.xlu0 %1973
        %1975 = vrot.lane.b32.xlu0 %v1654, 96
        %v1976 = vpop.permute.xlu0 %1975
        %1977 = vrot.lane.b32.xlu0 %v1719, 96
        %v1978 = vpop.permute.xlu0 %1977
        %1989 = vrot.lane.b32.xlu0 %v1247, 112
        %v1990 = vpop.permute.xlu0 %1989
        %1991 = vrot.lane.b32.xlu0 %v1383, 112
        %v1992 = vpop.permute.xlu0 %1991
        %1993 = vrot.lane.b32.xlu0 %v1519, 112
        %v1994 = vpop.permute.xlu0 %1993
        %1995 = vrot.lane.b32.xlu0 %v1655, 112
        %v1996 = vpop.permute.xlu0 %1995
        %1997 = vrot.lane.b32.xlu0 %v1723, 112
        %v1998 = vpop.permute.xlu0 %1997
        %vm2004 = vcmask 130048
        %v2005 = vsel %vm2004, %v628, %v1730
        %v2006 = vsel %vm2004, %v764, %v1732
        %v2007 = vsel %vm2004, %v900, %v1734
        %v2008 = vsel %vm2004, %v1036, %v1736
        %v2009 = vsel %vm2004, %v1084, %v1738
        %vm2010 = vcmask 261120
        %v2011 = vsel %vm2010, %v2005, %v1750
        %v2012 = vsel %vm2010, %v2006, %v1752
        %v2013 = vsel %vm2010, %v2007, %v1754
        %v2014 = vsel %vm2010, %v2008, %v1756
        %v2015 = vsel %vm2010, %v2009, %v1758
        %vm2016 = vcmask 392192
        %v2017 = vsel %vm2016, %v2011, %v1770
        %v2018 = vsel %vm2016, %v2012, %v1772
        %v2019 = vsel %vm2016, %v2013, %v1774
        %v2020 = vsel %vm2016, %v2014, %v1776
        %v2021 = vsel %vm2016, %v2015, %v1778
        %vm2022 = vcmask 523264
        %v2023 = vsel %vm2022, %v2017, %v1790
        %v2024 = vsel %vm2022, %v2018, %v1792
        %v2025 = vsel %vm2022, %v2019, %v1794
        %v2026 = vsel %vm2022, %v2020, %v1796
        %v2027 = vsel %vm2022, %v2021, %v1798
        %vm2028 = vcmask 654336
        %v2029 = vsel %vm2028, %v2023, %v1810
        %v2030 = vsel %vm2028, %v2024, %v1812
        %v2031 = vsel %vm2028, %v2025, %v1814
        %v2032 = vsel %vm2028, %v2026, %v1816
        %v2033 = vsel %vm2028, %v2027, %v1818
        %vm2034 = vcmask 785408
        %v2035 = vsel %vm2034, %v2029, %v1830
        %v2036 = vsel %vm2034, %v2030, %v1832
        %v2037 = vsel %vm2034, %v2031, %v1834
        %v2038 = vsel %vm2034, %v2032, %v1836
        %v2039 = vsel %vm2034, %v2033, %v1838
        %vm2040 = vcmask 916480
        %v2041 = vsel %vm2040, %v2035, %v1850
        %v2042 = vsel %vm2040, %v2036, %v1852
        %v2043 = vsel %vm2040, %v2037, %v1854
        %v2044 = vsel %vm2040, %v2038, %v1856
        %v2045 = vsel %vm2040, %v2039, %v1858
        %v2046 = vsel %vm2004, %v1240, %v1870
        %v2047 = vsel %vm2004, %v1376, %v1872
        %v2048 = vsel %vm2004, %v1512, %v1874
        %v2049 = vsel %vm2004, %v1648, %v1876
        %v2050 = vsel %vm2004, %v1696, %v1878
        %v2051 = vsel %vm2010, %v2046, %v1890
        %v2052 = vsel %vm2010, %v2047, %v1892
        %v2053 = vsel %vm2010, %v2048, %v1894
        %v2054 = vsel %vm2010, %v2049, %v1896
        %v2055 = vsel %vm2010, %v2050, %v1898
        %v2056 = vsel %vm2016, %v2051, %v1910
        %v2057 = vsel %vm2016, %v2052, %v1912
        %v2058 = vsel %vm2016, %v2053, %v1914
        %v2059 = vsel %vm2016, %v2054, %v1916
        %v2060 = vsel %vm2016, %v2055, %v1918
        %v2061 = vsel %vm2022, %v2056, %v1930
        %v2062 = vsel %vm2022, %v2057, %v1932
        %v2063 = vsel %vm2022, %v2058, %v1934
        %v2064 = vsel %vm2022, %v2059, %v1936
        %v2065 = vsel %vm2022, %v2060, %v1938
        %v2066 = vsel %vm2028, %v2061, %v1950
        %v2067 = vsel %vm2028, %v2062, %v1952
        %v2068 = vsel %vm2028, %v2063, %v1954
        %v2069 = vsel %vm2028, %v2064, %v1956
        %v2070 = vsel %vm2028, %v2065, %v1958
        %v2071 = vsel %vm2034, %v2066, %v1970
        %v2072 = vsel %vm2034, %v2067, %v1972
        %v2073 = vsel %vm2034, %v2068, %v1974
        %v2074 = vsel %vm2034, %v2069, %v1976
        %v2075 = vsel %vm2034, %v2070, %v1978
        %v2076 = vsel %vm2040, %v2071, %v1990
        %v2077 = vsel %vm2040, %v2072, %v1992
        %v2078 = vsel %vm2040, %v2073, %v1994
        %v2079 = vsel %vm2040, %v2074, %v1996
        %v2080 = vsel %vm2040, %v2075, %v1998
        %v2081 = vld [vmem:[%s1] sm:$0xff]
        %vm2082 = vcmask 293888
        %v2084 = vsel %vm2082, %v2081, 0
        %vm2086 = vcmask 1043456
        %v2088 = vsel %vm2086, %v2045, 0
        %v2091 = vsel %vm2086, %v2080, 0
        %2093 = vmatprep.subr.mxu0 %v2076
        %2094 = vmatpush1.msra.mxu0 %v2041
        %2095 = vmatprep.subr.mxu0 %v2077
        %2096 = vmatpush1.msra.mxu0 %v2042
        %2097 = vmatprep.subr.mxu0 %v2078
        %2098 = vmatpush1.msra.mxu0 %v2043
        %2099 = vmatprep.subr.mxu0 %v2079
        %2100 = vmatpush1.msra.mxu0 %v2044
        %2101 = vmatprep.subr.mxu0 %v2091
        %2102 = vmatpush1.msra.mxu0 %v2088
        %2103 = vmatprep.subr.mxu0 0.0
        %2104 = vmatpush1.msra.mxu0 0.0
        %2105 = vmatprep.subr.mxu0 0.0
        %2106 = vmatpush1.msra.mxu0 0.0
        %2107 = vmatprep.subr.mxu0 0.0
        %2108 = vmatpush1.msra.mxu0 0.0
        %2109 = vmatprep.subr.mxu0 0.0
        %2110 = vmatpush1.msra.mxu0 0.0
        %2111 = vmatprep.subr.mxu0 0.0
        %2112 = vmatpush1.msra.mxu0 0.0
        %2113 = vmatprep.subr.mxu0 0.0
        %2114 = vmatpush1.msra.mxu0 0.0
        %2115 = vmatprep.subr.mxu0 0.0
        %2116 = vmatpush1.msra.mxu0 0.0
        %2117 = vmatprep.subr.mxu0 0.0
        %2118 = vmatpush1.msra.mxu0 0.0
        %2119 = vmatprep.subr.mxu0 0.0
        %2120 = vmatpush1.msra.mxu0 0.0
        %2121 = vmatprep.subr.mxu0 0.0
        %2122 = vmatpush1.msra.mxu0 0.0
        %2123 = vmatprep.subr.mxu0 0.0
        %2124 = vmatpush1.msra.mxu0 0.0
        %2125 = vmatprep.subr.mxu0 0.0
        %2126 = vmatpush1.msra.mxu0 0.0
        %2127 = vmatprep.subr.mxu0 0.0
        %2128 = vmatpush1.msra.mxu0 0.0
        %2129 = vmatprep.subr.mxu0 0.0
        %2130 = vmatpush1.msra.mxu0 0.0
        %2131 = vmatprep.subr.mxu0 0.0
        %2132 = vmatpush1.msra.mxu0 0.0
        %2133 = vmatprep.subr.mxu0 0.0
        %2134 = vmatpush1.msra.mxu0 0.0
        %2135 = vmatprep.subr.mxu0 0.0
        %2136 = vmatpush1.msra.mxu0 0.0
        %2137 = vmatprep.subr.mxu0 0.0
        %2138 = vmatpush1.msra.mxu0 0.0
        %2139 = vmatprep.subr.mxu0 0.0
        %2140 = vmatpush1.msra.mxu0 0.0
        %2141 = vmatprep.subr.mxu0 0.0
        %2142 = vmatpush1.msra.mxu0 0.0
        %2143 = vmatprep.subr.mxu0 0.0
        %2144 = vmatpush1.msra.mxu0 0.0
        %2145 = vmatprep.subr.mxu0 0.0
        %2146 = vmatpush1.msra.mxu0 0.0
        %2147 = vmatprep.subr.mxu0 0.0
        %2148 = vmatpush1.msra.mxu0 0.0
        %2149 = vmatprep.subr.mxu0 0.0
        %2150 = vmatpush1.msra.mxu0 0.0
        %2151 = vmatprep.subr.mxu0 0.0
        %2152 = vmatpush1.msra.mxu0 0.0
        %2153 = vmatprep.subr.mxu0 0.0
        %2154 = vmatpush1.msra.mxu0 0.0
        %2155 = vmatprep.subr.mxu0 0.0
        %2156 = vmatpush1.msra.mxu0 0.0
        %2157 = vmatprep.mubr.f32.mxu0 0.0
        %2158 = vmatmul.mubr.f32.gmra.mrb[0].mxu0 %v2084
        %v2159 = vpop.f32.mrb[0].mxu0
        %v2160 = vadd.f32 0.0, %v2159
        %v2161 = vpop.f32.mrb[0].mxu0
        %v2162 = vadd.f32 0.0, %v2161
        %2163 = vdwg.mxu0
        %s2164 = smul.u32 %s19, 2
        %s2165 = smul.addr %s2164, 8
        %s2166 = scalar_lea.vmem [#allocation8], %s2165
        %2167 = vst [vmem:[%s2166] sm:$0xff] %v2160
        %2168 = vst [vmem:[%s2166 + $0x8] sm:$0xff] %v2162
        %v2169 = vld [vmem:[#allocation3] sm:$0xff]
        %v2170 = vadd.f32 %v2160, %v2162
        %2171 = vadd.xlane.f32.xlu0 %v2170
        %v2172 = vpop.xlane.xlu0 %2171
        %v2173 = vadd.f32 %v2169, %v2172
        %vm2174 = vcmask 7168
        %2175 = vst.msk [vmem:[#allocation3] sm:$0xff] %vm2174, %v2173
        %v2176 = vld [vmem:[#allocation4] sm:$0xff]
        %v2177 = vmul.f32 %v2160, %v2160
        %v2178 = vmul.f32 %v2162, %v2162
        %v2179 = vadd.f32 %v2177, %v2178
        %2180 = vadd.xlane.f32.xlu0 %v2179
        %v2181 = vpop.xlane.xlu0 %2180
        %v2182 = vadd.f32 %v2176, %v2181
        %2183 = vst.msk [vmem:[#allocation4] sm:$0xff] %vm2174, %v2182
        %p2184 = scmp.eq.s32.totalorder %s19, 1
        // Predicated region
        $region45: #{tpu_custom_call.1} parent=35 // pred_check
          %p2185 = pneg %p2184
        $region46: #{tpu_custom_call.1} parent=35 // pred_check_branch
          %2187 = sbr.rel (%p2185) target = $region48
        $region47: #{tpu_custom_call.1} parent=35 // pred_region
          %v2188 = vld [vmem:[#allocation3] sm:$0xff]
          %v2189 = vmul.f32 %v2188, 0.001953125
          %v2190 = vld [vmem:[#allocation4] sm:$0xff]
          %v2191 = vmul.f32 %v2190, 0.001953125
          %v2192 = vmul.f32 %v2189, %v2189
          %v2193 = vsub.f32 %v2191, %v2192
          %v2194 = vadd.f32 %v2193, 1e-05
          %v2195 = vrsqrt.pop %v2194
          %v2196 = vld [vmem:[%s2] sm:$0xff]
          %v2197 = vmul.f32 %v2195, %v2196
          %v2198 = vld [vmem:[%s3] sm:$0xff]
          %v2199 = vmul.f32 %v2189, %v2197
          %v2200 = vsub.f32 %v2198, %v2199
          %v2201 = vld [vmem:[#allocation8] sm:$0xff]
          %v2202 = vld [vmem:[#allocation8 + $0x8] sm:$0xff]
          %v2203 = vld [vmem:[#allocation8 + $0x10] sm:$0xff]
          %v2204 = vld [vmem:[#allocation8 + $0x18] sm:$0xff]
          %2206 = vset.pattern.permute.xlu0 0
          %2207 = vperm.xlu0 %2206, %v2197
          %v2208 = vpop.permute.xlu0 %2207
          %v2210 = vmul.f32 %v2201, %v2208
          %v2211 = vmul.f32 %v2202, %v2208
          %v2212 = vmul.f32 %v2203, %v2208
          %v2213 = vmul.f32 %v2204, %v2208
          %2215 = vset.pattern.permute.xlu0 0
          %2216 = vperm.xlu0 %2215, %v2200
          %v2217 = vpop.permute.xlu0 %2216
          %v2219 = vadd.f32 %v2210, %v2217
          %v2220 = vadd.f32 %v2211, %v2217
          %v2221 = vadd.f32 %v2212, %v2217
          %v2222 = vadd.f32 %v2213, %v2217
          %v2223 = vmax.f32 %v2219, 0.0
          %v2224 = vmax.f32 %v2220, 0.0
          %v2225 = vmax.f32 %v2221, 0.0
          %v2226 = vmax.f32 %v2222, 0.0
          %2227 = vst [vmem:[#allocation8] sm:$0xff] %v2223
          %2228 = vst [vmem:[#allocation8 + $0x8] sm:$0xff] %v2224
          %2229 = vst [vmem:[#allocation8 + $0x10] sm:$0xff] %v2225
          %2230 = vst [vmem:[#allocation8 + $0x18] sm:$0xff] %v2226
        $region48: #{tpu_custom_call.1} parent=35 // pred_fallthru
          _
        // Predicated region
        $region49: #{tpu_custom_call.1} parent=35 // pred_check
          %p2231 = pneg %p121
        $region50: #{tpu_custom_call.1} parent=35 // pred_check_branch
          %2233 = sbr.rel (%p2231) target = $region52
        $region51: #{tpu_custom_call.1} parent=35 // pred_region
          %s2235 = ssub.s32 512, 512
          %2236 = vsyncadd [#allocation7], %s2235
          %s2237 = sshll.u32 [#allocation8], 4
          %s2238 = int_to_ptr.vmem [resolvable:$true] %s2237
          %2243 = dma.vmem_to_hbm [thread:$0]  %s2238, 512, %s4, [#allocation7], 256, 256, 16
        $region52: #{tpu_custom_call.1} parent=35 // pred_fallthru
          _
        // Predicated region
        $region53: #{tpu_custom_call.1} parent=35 // pred_check
          %p2244 = pneg %p121
        $region54: #{tpu_custom_call.1} parent=35 // pred_check_branch
          %2246 = sbr.rel (%p2244) target = $region56
        $region55: #{tpu_custom_call.1} parent=35 // pred_region
          %2247 = dma.done [#allocation7], 512
        $region56: #{tpu_custom_call.1} parent=35 // pred_fallthru
          _
      $region36: #{tpu_custom_call.1} parent=5 // pred_fallthru
        _
      %p2248 = scmp.le.s32.totalorder 2, %s14
      // Predicated region
      $region57: #{tpu_custom_call.1} parent=5 // pred_check
        %p2249 = pneg %p2248
      $region58: #{tpu_custom_call.1} parent=5 // pred_check_branch
        %2251 = sbr.rel (%p2249) target = $region60
      $region59: #{tpu_custom_call.1} parent=5 // pred_region
        %s2252 = ssub.s32 %s14, 2
      $region60: #{tpu_custom_call.1} parent=5 // pred_fallthru
        _
    $region6: #{tpu_custom_call.1} parent=1 // loop_footer
      %s18 = sadd.s32 1, %s14
    $region7: #{tpu_custom_call.1} parent=1 // loop_footer_branch
      %13 = sbr.rel target = $region3
    $region8: #{tpu_custom_call.1} parent=1 // loop_exit
      _
    %2253 = vsyncpa [#allocation6], 1
    %s2254 = scalar_lea.sflag [#allocation6], 1
    %2255 = vsyncpa %s2254, 1
    %2256 = vsyncpa [#allocation7], 1
    %s2257 = scalar_lea.sflag [#allocation7], 1
    %2258 = vsyncpa %s2257, 1

</llo_original>
